<compile_context>
chip_gen: v6e
topology: v6e:2x2x1
jax: 0.10.0
libtpu: 0.0.40
codegen_flags: <defaults>
</compile_context>

<pallas_src>
import functools

import jax
import jax.numpy as jnp
import numpy as np
from jax import lax
from jax.experimental import pallas as pl
from jax.experimental.pallas import tpu as pltpu

C_IN, C1, C2 = 3, 16, 32          # fixed by the PyTorch module
N_CLASSES_PAD = 128               # lane-dense padded logit width


# ---------------------------------------------------------------------------
# Fused Pallas kernel: conv1 + relu + pool + conv2 + relu + pool + fc
# ---------------------------------------------------------------------------
def _convnet_kernel(a1_ref, m1_ref, b1_ref, m2_ref, b2_ref, wfc_ref, bfc_ref,
                    o_ref, p2_sc, *, batch, n_y):
    f32 = jnp.float32
    rows = a1_ref.shape[1]            # (H//4) * batch
    half1 = m1_ref.shape[2] // 2      # (W//2) * C1  (conv1 W-pool half)
    half2 = m2_ref.shape[2] // 2      # (W//4) * C2  (conv2 W-pool half)

    # ---- conv1 + bias, 4 output-row phases p (output row i = 4q + p) -------
    # Tap ky of phase p reads the padded input rows 4q + (p + ky), which the
    # wrapper pre-packed as a1_ref[p + ky] (rows ordered (q, n)).
    b1 = b1_ref[...]
    acc1 = []
    for p in range(4):
        acc = b1
        for ky in range(3):
            acc = acc + jnp.dot(a1_ref[p + ky], m1_ref[ky],
                                preferred_element_type=f32)
        acc1.append(acc)                                   # (rows, 2*half1)

    # ---- ReLU + 2x2 maxpool fused in the epilogue ---------------------------
    # H-pool = max of adjacent row phases, W-pool = max of the two lane halves
    # (weight packing interleaves output columns as (j%2, j//2, c)).
    t_e = jnp.maximum(acc1[0], acc1[1])                    # pooled rows io=2q
    t_o = jnp.maximum(acc1[2], acc1[3])                    # pooled rows io=2q+1
    p1_even = jnp.maximum(jnp.maximum(t_e[:, :half1], t_e[:, half1:]), 0.0)
    p1_odd = jnp.maximum(jnp.maximum(t_o[:, :half1], t_o[:, half1:]), 0.0)

    # ---- conv2 vertical zero padding: shift rows by one pooled row ----------
    # z_lo[r] = p1_odd[r - batch] (zeros on top), z_hi[r] = p1_even[r + batch]
    # (zeros at the bottom); built with exact 0/1 shift matrices on the MXU.
    ri = lax.broadcasted_iota(jnp.int32, (rows, rows), 0)
    ci = lax.broadcasted_iota(jnp.int32, (rows, rows), 1)
    shift_dn = (ri - ci == batch).astype(f32)
    shift_up = (ci - ri == batch).astype(f32)
    z_lo = jnp.dot(shift_dn, p1_odd, preferred_element_type=f32)
    z_hi = jnp.dot(shift_up, p1_even, preferred_element_type=f32)

    # ---- conv2 + bias, 2 output-row phases (even / odd output row) ----------
    b2 = b2_ref[...]
    acc2_e = (b2
              + jnp.dot(z_lo, m2_ref[0], preferred_element_type=f32)
              + jnp.dot(p1_even, m2_ref[1], preferred_element_type=f32)
              + jnp.dot(p1_odd, m2_ref[2], preferred_element_type=f32))
    acc2_o = (b2
              + jnp.dot(p1_even, m2_ref[0], preferred_element_type=f32)
              + jnp.dot(p1_odd, m2_ref[1], preferred_element_type=f32)
              + jnp.dot(z_hi, m2_ref[2], preferred_element_type=f32))

    # ---- ReLU + 2x2 maxpool --------------------------------------------------
    t2 = jnp.maximum(acc2_e, acc2_o)
    p2 = jnp.maximum(jnp.maximum(t2[:, :half2], t2[:, half2:]), 0.0)
    p2_sc[...] = p2                 # rows (io2, n), lanes jo2*C2 + co2

    # ---- fully connected (NCHW flatten folded into the packed fc weight) ----
    out = bfc_ref[...]
    for y in range(n_y):
        out = out + jnp.dot(p2_sc[y * batch:(y + 1) * batch, :], wfc_ref[y],
                            preferred_element_type=f32)
    o_ref[...] = out                # (batch, 128) -- dense 128-lane store


# ---------------------------------------------------------------------------
# Host-side parameter packing (done once, outside the forward pass)
# ---------------------------------------------------------------------------
def convert_torch_params(tw, H, W):
    """Pack torch-layout params into the matmul layouts used by the kernel."""
    w1 = np.asarray(tw["w1"], np.float32)     # (C1, C_IN, 3, 3)
    b1 = np.asarray(tw["b1"], np.float32)
    w2 = np.asarray(tw["w2"], np.float32)     # (C2, C1, 3, 3)
    b2 = np.asarray(tw["b2"], np.float32)
    wfc = np.asarray(tw["w_fc"], np.float32)  # (ncls, C2*(H//4)*(W//4))
    bfc = np.asarray(tw["b_fc"], np.float32)
    ncls = wfc.shape[0]
    assert ncls <= N_CLASSES_PAD

    def conv_row_mats(w, cin, cout, width):
        # M[ky][j_in*cin + ci, b*half + jo*cout + co] = w[co, ci, ky, kx]
        # with output column j_out = 2*jo + b and kx = j_in - j_out + 1.
        # Horizontal zero padding handled by simply omitting j_in outside [0,W).
        half = (width // 2) * cout
        M = np.zeros((3, width * cin, 2 * half), np.float32)
        for ky in range(3):
            for jo in range(width // 2):
                for b in range(2):
                    j_out = 2 * jo + b
                    col0 = b * half + jo * cout
                    for kx in range(3):
                        j_in = j_out + kx - 1
                        if 0 <= j_in < width:
                            M[ky, j_in * cin:(j_in + 1) * cin,
                              col0:col0 + cout] = w[:, :, ky, kx].T
        return M

    W2 = W // 2
    m1 = conv_row_mats(w1, C_IN, C1, W)       # (3, W*C_IN, W*C1)
    m2 = conv_row_mats(w2, C1, C2, W2)        # (3, W2*C1, W2*C2)
    b1_row = np.tile(b1, W)[None, :]          # lane = (b*(W//2)+jo)*C1 + co
    b2_row = np.tile(b2, W2)[None, :]

    # FC: torch flattens pool2 as NCHW (c, y, x); our p2 rows are (y, n) and
    # lanes are x*C2 + c, so permute + pad the fc weight accordingly.
    ny, nx = H // 4, W // 4
    wfc_y = np.zeros((ny, nx * C2, N_CLASSES_PAD), np.float32)
    for y in range(ny):
        for xx in range(nx):
            for co in range(C2):
                wfc_y[y, xx * C2 + co, :ncls] = wfc[:, co * ny * nx + y * nx + xx]
    bfc_row = np.zeros((1, N_CLASSES_PAD), np.float32)
    bfc_row[0, :ncls] = bfc

    return {
        "m1": jnp.asarray(m1), "b1": jnp.asarray(b1_row),
        "m2": jnp.asarray(m2), "b2": jnp.asarray(b2_row),
        "wfc": jnp.asarray(wfc_y), "bfc": jnp.asarray(bfc_row),
    }


# ---------------------------------------------------------------------------
# Forward pass wrapper
# ---------------------------------------------------------------------------
def convnet_forward(x_nchw, params, num_classes=10):
    N, Cin, H, W = x_nchw.shape
    assert Cin == C_IN and H % 4 == 0 and W % 4 == 0
    q1 = H // 4

    # Tiny input prep (one-time XLA work on the raw 6 KiB input): NHWC rows
    # with lane = j*Cin + ci, zero-pad vertically, and extract the 6 conv1
    # tap-row operands (padded rows t, t+4, t+8, ... for t = p + ky in [0,6)).
    rows = jnp.transpose(x_nchw, (0, 2, 3, 1)).reshape(N, H, W * Cin)
    prows = jnp.pad(rows, ((0, 0), (1, 1), (0, 0)))            # (N, H+2, W*Cin)
    ops = []
    for t in range(6):
        s = lax.slice_in_dim(prows, t, t + 4 * (q1 - 1) + 1, stride=4, axis=1)
        ops.append(jnp.transpose(s, (1, 0, 2)).reshape(q1 * N, W * Cin))
    a1 = jnp.stack(ops, axis=0)                                # (6, q1*N, W*Cin)

    kernel = functools.partial(_convnet_kernel, batch=N, n_y=q1)
    out_pad = pl.pallas_call(
        kernel,
        out_shape=jax.ShapeDtypeStruct((N, N_CLASSES_PAD), jnp.float32),
        grid=(1,),
        in_specs=[
            pl.BlockSpec(a1.shape, lambda i: (0, 0, 0)),
            pl.BlockSpec(params["m1"].shape, lambda i: (0, 0, 0)),
            pl.BlockSpec(params["b1"].shape, lambda i: (0, 0)),
            pl.BlockSpec(params["m2"].shape, lambda i: (0, 0, 0)),
            pl.BlockSpec(params["b2"].shape, lambda i: (0, 0)),
            pl.BlockSpec(params["wfc"].shape, lambda i: (0, 0, 0)),
            pl.BlockSpec(params["bfc"].shape, lambda i: (0, 0)),
        ],
        out_specs=pl.BlockSpec((N, N_CLASSES_PAD), lambda i: (0, 0)),
        scratch_shapes=[pltpu.VMEM((q1 * N, (W // 4) * C2), jnp.float32)],
        compiler_params=pltpu.CompilerParams(dimension_semantics=("arbitrary",)),
    )(a1, params["m1"], params["b1"], params["m2"], params["b2"],
      params["wfc"], params["bfc"])
    return out_pad[:, :num_classes]


# ---------------------------------------------------------------------------
# Pure-JAX reference (torch semantics) for validation
# ---------------------------------------------------------------------------
def torch_reference(x_nchw, tw):
    def conv(x, w, b):
        y = lax.conv_general_dilated(
            x, w, window_strides=(1, 1), padding=((1, 1), (1, 1)),
            dimension_numbers=("NCHW", "OIHW", "NCHW"),
            precision=lax.Precision.HIGHEST,
        )
        return y + b[None, :, None, None]

    def pool(x):
        return lax.reduce_window(
            x, -jnp.inf, lax.max, (1, 1, 2, 2), (1, 1, 2, 2), "VALID"
        )

    y = pool(jnp.maximum(conv(x_nchw, tw["w1"], tw["b1"]), 0.0))
    y = pool(jnp.maximum(conv(y, tw["w2"], tw["b2"]), 0.0))
    y = y.reshape(y.shape[0], -1)
    return jnp.dot(y, tw["w_fc"].T, precision=lax.Precision.HIGHEST) + tw["b_fc"]


# ---------------------------------------------------------------------------
if __name__ == "__main__":
    # ConvNet(input_size_x=16, input_size_y=16, num_classes=10); batch = 2
    N, H, W = 2, 16, 16
    num_classes = 10
    fc_in = C2 * (H // 4) * (W // 4)  # 512

    key = jax.random.PRNGKey(0)
    kx, k1, k2, k3, k4, k5, k6 = jax.random.split(key, 7)

    x = jax.random.normal(kx, (N, C_IN, H, W), dtype=jnp.float32)

    # deterministic synthetic parameters in torch layouts
    torch_params = {
        "w1": 0.1 * jax.random.normal(k1, (C1, C_IN, 3, 3), dtype=jnp.float32),
        "b1": 0.1 * jax.random.normal(k2, (C1,), dtype=jnp.float32),
        "w2": 0.1 * jax.random.normal(k3, (C2, C1, 3, 3), dtype=jnp.float32),
        "b2": 0.1 * jax.random.normal(k4, (C2,), dtype=jnp.float32),
        "w_fc": 0.05 * jax.random.normal(k5, (num_classes, fc_in), dtype=jnp.float32),
        "b_fc": 0.05 * jax.random.normal(k6, (num_classes,), dtype=jnp.float32),
    }
    params = convert_torch_params(torch_params, H, W)

    fwd = jax.jit(functools.partial(convnet_forward, num_classes=num_classes))
    out = jax.block_until_ready(fwd(x, params))
    assert out.shape == (N, num_classes) and out.dtype == jnp.float32

    # Reference uses HIGHEST precision; the kernel uses the default MXU
    # precision (per perf review), so allow bf16-pass-level tolerance.
    ref = jax.block_until_ready(torch_reference(x, torch_params))
    np.testing.assert_allclose(np.asarray(out), np.asarray(ref),
                               rtol=2e-2, atol=2e-2)

    print("KERNEL_OK")
</pallas_src>

<mosaic_0001>
module attributes {stable_mosaic.version = 11 : i64} {
  func.func @_convnet_kernel(%arg0: i32, %arg1: memref<6x8x48xf32, #tpu.memory_space<vmem>>, %arg2: memref<3x48x256xf32, #tpu.memory_space<vmem>>, %arg3: memref<1x256xf32, #tpu.memory_space<vmem>>, %arg4: memref<3x128x256xf32, #tpu.memory_space<vmem>>, %arg5: memref<1x256xf32, #tpu.memory_space<vmem>>, %arg6: memref<4x128x128xf32, #tpu.memory_space<vmem>>, %arg7: memref<1x128xf32, #tpu.memory_space<vmem>>, %arg8: memref<2x128xf32, #tpu.memory_space<vmem>>, %arg9: memref<8x128xf32, #tpu.memory_space<vmem>>) attributes {dimension_semantics = [#tpu.dimension_semantics<arbitrary>], iteration_bounds = array<i64: 1>, scalar_prefetch = 0 : i64, scratch_operands = 1 : i64, tpu.core_type = #tpu.core_type<tc>, window_params = [{pipeline_mode = #tpu.pipeline_mode<synchronous>, transform_indices = @transform_0, window_bounds = array<i64: 6, 8, 48>}, {pipeline_mode = #tpu.pipeline_mode<synchronous>, transform_indices = @transform_1, window_bounds = array<i64: 3, 48, 256>}, {pipeline_mode = #tpu.pipeline_mode<synchronous>, transform_indices = @transform_2, window_bounds = array<i64: 1, 256>}, {pipeline_mode = #tpu.pipeline_mode<synchronous>, transform_indices = @transform_3, window_bounds = array<i64: 3, 128, 256>}, {pipeline_mode = #tpu.pipeline_mode<synchronous>, transform_indices = @transform_4, window_bounds = array<i64: 1, 256>}, {pipeline_mode = #tpu.pipeline_mode<synchronous>, transform_indices = @transform_5, window_bounds = array<i64: 4, 128, 128>}, {pipeline_mode = #tpu.pipeline_mode<synchronous>, transform_indices = @transform_6, window_bounds = array<i64: 1, 128>}, {pipeline_mode = #tpu.pipeline_mode<synchronous>, transform_indices = @transform_7, window_bounds = array<i64: 2, 128>}]} {
    %c0 = arith.constant 0 : index
    %c0_0 = arith.constant 0 : index
    %0 = vector.load %arg3[%c0, %c0_0] : memref<1x256xf32, #tpu.memory_space<vmem>>, vector<1x256xf32>
    %c0_1 = arith.constant 0 : index
    %c0_2 = arith.constant 0 : index
    %c0_3 = arith.constant 0 : index
    %1 = vector.load %arg1[%c0_1, %c0_2, %c0_3] : memref<6x8x48xf32, #tpu.memory_space<vmem>>, vector<1x8x48xf32>
    %2 = vector.shape_cast %1 : vector<1x8x48xf32> to vector<8x48xf32>
    %c0_4 = arith.constant 0 : index
    %c0_5 = arith.constant 0 : index
    %c0_6 = arith.constant 0 : index
    %3 = vector.load %arg2[%c0_4, %c0_5, %c0_6] : memref<3x48x256xf32, #tpu.memory_space<vmem>>, vector<1x48x256xf32>
    %4 = vector.shape_cast %3 : vector<1x48x256xf32> to vector<48x256xf32>
    %cst = arith.constant dense<0.000000e+00> : vector<8x256xf32>
    %5 = tpu.matmul %2, %4, %cst {dimension_numbers = #tpu.dot_dimension_numbers<[1], [0], [0], [1], [0, 0, 1, 1], [], []>} : vector<8x48xf32>, vector<48x256xf32>, vector<8x256xf32> -> vector<8x256xf32>
    %6 = vector.broadcast %0 : vector<1x256xf32> to vector<8x256xf32>
    %7 = arith.addf %6, %5 : vector<8x256xf32>
    %c1 = arith.constant 1 : index
    %c0_7 = arith.constant 0 : index
    %c0_8 = arith.constant 0 : index
    %8 = vector.load %arg1[%c1, %c0_7, %c0_8] : memref<6x8x48xf32, #tpu.memory_space<vmem>>, vector<1x8x48xf32>
    %9 = vector.shape_cast %8 : vector<1x8x48xf32> to vector<8x48xf32>
    %c1_9 = arith.constant 1 : index
    %c0_10 = arith.constant 0 : index
    %c0_11 = arith.constant 0 : index
    %10 = vector.load %arg2[%c1_9, %c0_10, %c0_11] : memref<3x48x256xf32, #tpu.memory_space<vmem>>, vector<1x48x256xf32>
    %11 = vector.shape_cast %10 : vector<1x48x256xf32> to vector<48x256xf32>
    %cst_12 = arith.constant dense<0.000000e+00> : vector<8x256xf32>
    %12 = tpu.matmul %9, %11, %cst_12 {dimension_numbers = #tpu.dot_dimension_numbers<[1], [0], [0], [1], [0, 0, 1, 1], [], []>} : vector<8x48xf32>, vector<48x256xf32>, vector<8x256xf32> -> vector<8x256xf32>
    %13 = arith.addf %7, %12 : vector<8x256xf32>
    %c2 = arith.constant 2 : index
    %c0_13 = arith.constant 0 : index
    %c0_14 = arith.constant 0 : index
    %14 = vector.load %arg1[%c2, %c0_13, %c0_14] : memref<6x8x48xf32, #tpu.memory_space<vmem>>, vector<1x8x48xf32>
    %15 = vector.shape_cast %14 : vector<1x8x48xf32> to vector<8x48xf32>
    %c2_15 = arith.constant 2 : index
    %c0_16 = arith.constant 0 : index
    %c0_17 = arith.constant 0 : index
    %16 = vector.load %arg2[%c2_15, %c0_16, %c0_17] : memref<3x48x256xf32, #tpu.memory_space<vmem>>, vector<1x48x256xf32>
    %17 = vector.shape_cast %16 : vector<1x48x256xf32> to vector<48x256xf32>
    %cst_18 = arith.constant dense<0.000000e+00> : vector<8x256xf32>
    %18 = tpu.matmul %15, %17, %cst_18 {dimension_numbers = #tpu.dot_dimension_numbers<[1], [0], [0], [1], [0, 0, 1, 1], [], []>} : vector<8x48xf32>, vector<48x256xf32>, vector<8x256xf32> -> vector<8x256xf32>
    %19 = arith.addf %13, %18 : vector<8x256xf32>
    %c1_19 = arith.constant 1 : index
    %c0_20 = arith.constant 0 : index
    %c0_21 = arith.constant 0 : index
    %20 = vector.load %arg1[%c1_19, %c0_20, %c0_21] : memref<6x8x48xf32, #tpu.memory_space<vmem>>, vector<1x8x48xf32>
    %21 = vector.shape_cast %20 : vector<1x8x48xf32> to vector<8x48xf32>
    %c0_22 = arith.constant 0 : index
    %c0_23 = arith.constant 0 : index
    %c0_24 = arith.constant 0 : index
    %22 = vector.load %arg2[%c0_22, %c0_23, %c0_24] : memref<3x48x256xf32, #tpu.memory_space<vmem>>, vector<1x48x256xf32>
    %23 = vector.shape_cast %22 : vector<1x48x256xf32> to vector<48x256xf32>
    %cst_25 = arith.constant dense<0.000000e+00> : vector<8x256xf32>
    %24 = tpu.matmul %21, %23, %cst_25 {dimension_numbers = #tpu.dot_dimension_numbers<[1], [0], [0], [1], [0, 0, 1, 1], [], []>} : vector<8x48xf32>, vector<48x256xf32>, vector<8x256xf32> -> vector<8x256xf32>
    %25 = vector.broadcast %0 : vector<1x256xf32> to vector<8x256xf32>
    %26 = arith.addf %25, %24 : vector<8x256xf32>
    %c2_26 = arith.constant 2 : index
    %c0_27 = arith.constant 0 : index
    %c0_28 = arith.constant 0 : index
    %27 = vector.load %arg1[%c2_26, %c0_27, %c0_28] : memref<6x8x48xf32, #tpu.memory_space<vmem>>, vector<1x8x48xf32>
    %28 = vector.shape_cast %27 : vector<1x8x48xf32> to vector<8x48xf32>
    %c1_29 = arith.constant 1 : index
    %c0_30 = arith.constant 0 : index
    %c0_31 = arith.constant 0 : index
    %29 = vector.load %arg2[%c1_29, %c0_30, %c0_31] : memref<3x48x256xf32, #tpu.memory_space<vmem>>, vector<1x48x256xf32>
    %30 = vector.shape_cast %29 : vector<1x48x256xf32> to vector<48x256xf32>
    %cst_32 = arith.constant dense<0.000000e+00> : vector<8x256xf32>
    %31 = tpu.matmul %28, %30, %cst_32 {dimension_numbers = #tpu.dot_dimension_numbers<[1], [0], [0], [1], [0, 0, 1, 1], [], []>} : vector<8x48xf32>, vector<48x256xf32>, vector<8x256xf32> -> vector<8x256xf32>
    %32 = arith.addf %26, %31 : vector<8x256xf32>
    %c3 = arith.constant 3 : index
    %c0_33 = arith.constant 0 : index
    %c0_34 = arith.constant 0 : index
    %33 = vector.load %arg1[%c3, %c0_33, %c0_34] : memref<6x8x48xf32, #tpu.memory_space<vmem>>, vector<1x8x48xf32>
    %34 = vector.shape_cast %33 : vector<1x8x48xf32> to vector<8x48xf32>
    %c2_35 = arith.constant 2 : index
    %c0_36 = arith.constant 0 : index
    %c0_37 = arith.constant 0 : index
    %35 = vector.load %arg2[%c2_35, %c0_36, %c0_37] : memref<3x48x256xf32, #tpu.memory_space<vmem>>, vector<1x48x256xf32>
    %36 = vector.shape_cast %35 : vector<1x48x256xf32> to vector<48x256xf32>
    %cst_38 = arith.constant dense<0.000000e+00> : vector<8x256xf32>
    %37 = tpu.matmul %34, %36, %cst_38 {dimension_numbers = #tpu.dot_dimension_numbers<[1], [0], [0], [1], [0, 0, 1, 1], [], []>} : vector<8x48xf32>, vector<48x256xf32>, vector<8x256xf32> -> vector<8x256xf32>
    %38 = arith.addf %32, %37 : vector<8x256xf32>
    %c2_39 = arith.constant 2 : index
    %c0_40 = arith.constant 0 : index
    %c0_41 = arith.constant 0 : index
    %39 = vector.load %arg1[%c2_39, %c0_40, %c0_41] : memref<6x8x48xf32, #tpu.memory_space<vmem>>, vector<1x8x48xf32>
    %40 = vector.shape_cast %39 : vector<1x8x48xf32> to vector<8x48xf32>
    %c0_42 = arith.constant 0 : index
    %c0_43 = arith.constant 0 : index
    %c0_44 = arith.constant 0 : index
    %41 = vector.load %arg2[%c0_42, %c0_43, %c0_44] : memref<3x48x256xf32, #tpu.memory_space<vmem>>, vector<1x48x256xf32>
    %42 = vector.shape_cast %41 : vector<1x48x256xf32> to vector<48x256xf32>
    %cst_45 = arith.constant dense<0.000000e+00> : vector<8x256xf32>
    %43 = tpu.matmul %40, %42, %cst_45 {dimension_numbers = #tpu.dot_dimension_numbers<[1], [0], [0], [1], [0, 0, 1, 1], [], []>} : vector<8x48xf32>, vector<48x256xf32>, vector<8x256xf32> -> vector<8x256xf32>
    %44 = vector.broadcast %0 : vector<1x256xf32> to vector<8x256xf32>
    %45 = arith.addf %44, %43 : vector<8x256xf32>
    %c3_46 = arith.constant 3 : index
    %c0_47 = arith.constant 0 : index
    %c0_48 = arith.constant 0 : index
    %46 = vector.load %arg1[%c3_46, %c0_47, %c0_48] : memref<6x8x48xf32, #tpu.memory_space<vmem>>, vector<1x8x48xf32>
    %47 = vector.shape_cast %46 : vector<1x8x48xf32> to vector<8x48xf32>
    %c1_49 = arith.constant 1 : index
    %c0_50 = arith.constant 0 : index
    %c0_51 = arith.constant 0 : index
    %48 = vector.load %arg2[%c1_49, %c0_50, %c0_51] : memref<3x48x256xf32, #tpu.memory_space<vmem>>, vector<1x48x256xf32>
    %49 = vector.shape_cast %48 : vector<1x48x256xf32> to vector<48x256xf32>
    %cst_52 = arith.constant dense<0.000000e+00> : vector<8x256xf32>
    %50 = tpu.matmul %47, %49, %cst_52 {dimension_numbers = #tpu.dot_dimension_numbers<[1], [0], [0], [1], [0, 0, 1, 1], [], []>} : vector<8x48xf32>, vector<48x256xf32>, vector<8x256xf32> -> vector<8x256xf32>
    %51 = arith.addf %45, %50 : vector<8x256xf32>
    %c4 = arith.constant 4 : index
    %c0_53 = arith.constant 0 : index
    %c0_54 = arith.constant 0 : index
    %52 = vector.load %arg1[%c4, %c0_53, %c0_54] : memref<6x8x48xf32, #tpu.memory_space<vmem>>, vector<1x8x48xf32>
    %53 = vector.shape_cast %52 : vector<1x8x48xf32> to vector<8x48xf32>
    %c2_55 = arith.constant 2 : index
    %c0_56 = arith.constant 0 : index
    %c0_57 = arith.constant 0 : index
    %54 = vector.load %arg2[%c2_55, %c0_56, %c0_57] : memref<3x48x256xf32, #tpu.memory_space<vmem>>, vector<1x48x256xf32>
    %55 = vector.shape_cast %54 : vector<1x48x256xf32> to vector<48x256xf32>
    %cst_58 = arith.constant dense<0.000000e+00> : vector<8x256xf32>
    %56 = tpu.matmul %53, %55, %cst_58 {dimension_numbers = #tpu.dot_dimension_numbers<[1], [0], [0], [1], [0, 0, 1, 1], [], []>} : vector<8x48xf32>, vector<48x256xf32>, vector<8x256xf32> -> vector<8x256xf32>
    %57 = arith.addf %51, %56 : vector<8x256xf32>
    %c3_59 = arith.constant 3 : index
    %c0_60 = arith.constant 0 : index
    %c0_61 = arith.constant 0 : index
    %58 = vector.load %arg1[%c3_59, %c0_60, %c0_61] : memref<6x8x48xf32, #tpu.memory_space<vmem>>, vector<1x8x48xf32>
    %59 = vector.shape_cast %58 : vector<1x8x48xf32> to vector<8x48xf32>
    %c0_62 = arith.constant 0 : index
    %c0_63 = arith.constant 0 : index
    %c0_64 = arith.constant 0 : index
    %60 = vector.load %arg2[%c0_62, %c0_63, %c0_64] : memref<3x48x256xf32, #tpu.memory_space<vmem>>, vector<1x48x256xf32>
    %61 = vector.shape_cast %60 : vector<1x48x256xf32> to vector<48x256xf32>
    %cst_65 = arith.constant dense<0.000000e+00> : vector<8x256xf32>
    %62 = tpu.matmul %59, %61, %cst_65 {dimension_numbers = #tpu.dot_dimension_numbers<[1], [0], [0], [1], [0, 0, 1, 1], [], []>} : vector<8x48xf32>, vector<48x256xf32>, vector<8x256xf32> -> vector<8x256xf32>
    %63 = vector.broadcast %0 : vector<1x256xf32> to vector<8x256xf32>
    %64 = arith.addf %63, %62 : vector<8x256xf32>
    %c4_66 = arith.constant 4 : index
    %c0_67 = arith.constant 0 : index
    %c0_68 = arith.constant 0 : index
    %65 = vector.load %arg1[%c4_66, %c0_67, %c0_68] : memref<6x8x48xf32, #tpu.memory_space<vmem>>, vector<1x8x48xf32>
    %66 = vector.shape_cast %65 : vector<1x8x48xf32> to vector<8x48xf32>
    %c1_69 = arith.constant 1 : index
    %c0_70 = arith.constant 0 : index
    %c0_71 = arith.constant 0 : index
    %67 = vector.load %arg2[%c1_69, %c0_70, %c0_71] : memref<3x48x256xf32, #tpu.memory_space<vmem>>, vector<1x48x256xf32>
    %68 = vector.shape_cast %67 : vector<1x48x256xf32> to vector<48x256xf32>
    %cst_72 = arith.constant dense<0.000000e+00> : vector<8x256xf32>
    %69 = tpu.matmul %66, %68, %cst_72 {dimension_numbers = #tpu.dot_dimension_numbers<[1], [0], [0], [1], [0, 0, 1, 1], [], []>} : vector<8x48xf32>, vector<48x256xf32>, vector<8x256xf32> -> vector<8x256xf32>
    %70 = arith.addf %64, %69 : vector<8x256xf32>
    %c5 = arith.constant 5 : index
    %c0_73 = arith.constant 0 : index
    %c0_74 = arith.constant 0 : index
    %71 = vector.load %arg1[%c5, %c0_73, %c0_74] : memref<6x8x48xf32, #tpu.memory_space<vmem>>, vector<1x8x48xf32>
    %72 = vector.shape_cast %71 : vector<1x8x48xf32> to vector<8x48xf32>
    %c2_75 = arith.constant 2 : index
    %c0_76 = arith.constant 0 : index
    %c0_77 = arith.constant 0 : index
    %73 = vector.load %arg2[%c2_75, %c0_76, %c0_77] : memref<3x48x256xf32, #tpu.memory_space<vmem>>, vector<1x48x256xf32>
    %74 = vector.shape_cast %73 : vector<1x48x256xf32> to vector<48x256xf32>
    %cst_78 = arith.constant dense<0.000000e+00> : vector<8x256xf32>
    %75 = tpu.matmul %72, %74, %cst_78 {dimension_numbers = #tpu.dot_dimension_numbers<[1], [0], [0], [1], [0, 0, 1, 1], [], []>} : vector<8x48xf32>, vector<48x256xf32>, vector<8x256xf32> -> vector<8x256xf32>
    %76 = arith.addf %70, %75 : vector<8x256xf32>
    %77 = arith.maximumf %19, %38 : vector<8x256xf32>
    %78 = arith.maximumf %57, %76 : vector<8x256xf32>
    %79 = vector.extract_strided_slice %77 {offsets = [0, 0], sizes = [8, 128], strides = [1, 1]} : vector<8x256xf32> to vector<8x128xf32>
    %80 = vector.extract_strided_slice %77 {offsets = [0, 128], sizes = [8, 128], strides = [1, 1]} : vector<8x256xf32> to vector<8x128xf32>
    %81 = arith.maximumf %79, %80 : vector<8x128xf32>
    %cst_79 = arith.constant 0.000000e+00 : f32
    %82 = vector.broadcast %cst_79 : f32 to vector<8x128xf32>
    %83 = arith.maximumf %81, %82 : vector<8x128xf32>
    %84 = vector.extract_strided_slice %78 {offsets = [0, 0], sizes = [8, 128], strides = [1, 1]} : vector<8x256xf32> to vector<8x128xf32>
    %85 = vector.extract_strided_slice %78 {offsets = [0, 128], sizes = [8, 128], strides = [1, 1]} : vector<8x256xf32> to vector<8x128xf32>
    %86 = arith.maximumf %84, %85 : vector<8x128xf32>
    %cst_80 = arith.constant 0.000000e+00 : f32
    %87 = vector.broadcast %cst_80 : f32 to vector<8x128xf32>
    %88 = arith.maximumf %86, %87 : vector<8x128xf32>
    %89 = tpu.iota {dimensions = array<i32: 0>} : vector<8x8xi32>
    %90 = tpu.iota {dimensions = array<i32: 1>} : vector<8x8xi32>
    %91 = arith.subi %89, %90 : vector<8x8xi32>
    %c2_i32 = arith.constant 2 : i32
    %92 = vector.broadcast %c2_i32 : i32 to vector<8x8xi32>
    %93 = arith.cmpi eq, %91, %92 : vector<8x8xi32>
    %94 = arith.extui %93 : vector<8x8xi1> to vector<8x8xi32>
    %95 = arith.sitofp %94 : vector<8x8xi32> to vector<8x8xf32>
    %96 = arith.subi %90, %89 : vector<8x8xi32>
    %c2_i32_81 = arith.constant 2 : i32
    %97 = vector.broadcast %c2_i32_81 : i32 to vector<8x8xi32>
    %98 = arith.cmpi eq, %96, %97 : vector<8x8xi32>
    %99 = arith.extui %98 : vector<8x8xi1> to vector<8x8xi32>
    %100 = arith.sitofp %99 : vector<8x8xi32> to vector<8x8xf32>
    %cst_82 = arith.constant dense<0.000000e+00> : vector<8x128xf32>
    %101 = tpu.matmul %95, %88, %cst_82 {dimension_numbers = #tpu.dot_dimension_numbers<[1], [0], [0], [1], [0, 0, 1, 1], [], []>} : vector<8x8xf32>, vector<8x128xf32>, vector<8x128xf32> -> vector<8x128xf32>
    %cst_83 = arith.constant dense<0.000000e+00> : vector<8x128xf32>
    %102 = tpu.matmul %100, %83, %cst_83 {dimension_numbers = #tpu.dot_dimension_numbers<[1], [0], [0], [1], [0, 0, 1, 1], [], []>} : vector<8x8xf32>, vector<8x128xf32>, vector<8x128xf32> -> vector<8x128xf32>
    %c0_84 = arith.constant 0 : index
    %c0_85 = arith.constant 0 : index
    %103 = vector.load %arg5[%c0_84, %c0_85] : memref<1x256xf32, #tpu.memory_space<vmem>>, vector<1x256xf32>
    %c0_86 = arith.constant 0 : index
    %c0_87 = arith.constant 0 : index
    %c0_88 = arith.constant 0 : index
    %104 = vector.load %arg4[%c0_86, %c0_87, %c0_88] : memref<3x128x256xf32, #tpu.memory_space<vmem>>, vector<1x128x256xf32>
    %105 = vector.shape_cast %104 : vector<1x128x256xf32> to vector<128x256xf32>
    %cst_89 = arith.constant dense<0.000000e+00> : vector<8x256xf32>
    %106 = tpu.matmul %101, %105, %cst_89 {dimension_numbers = #tpu.dot_dimension_numbers<[1], [0], [0], [1], [0, 0, 1, 1], [], []>} : vector<8x128xf32>, vector<128x256xf32>, vector<8x256xf32> -> vector<8x256xf32>
    %107 = vector.broadcast %103 : vector<1x256xf32> to vector<8x256xf32>
    %108 = arith.addf %107, %106 : vector<8x256xf32>
    %c1_90 = arith.constant 1 : index
    %c0_91 = arith.constant 0 : index
    %c0_92 = arith.constant 0 : index
    %109 = vector.load %arg4[%c1_90, %c0_91, %c0_92] : memref<3x128x256xf32, #tpu.memory_space<vmem>>, vector<1x128x256xf32>
    %110 = vector.shape_cast %109 : vector<1x128x256xf32> to vector<128x256xf32>
    %cst_93 = arith.constant dense<0.000000e+00> : vector<8x256xf32>
    %111 = tpu.matmul %83, %110, %cst_93 {dimension_numbers = #tpu.dot_dimension_numbers<[1], [0], [0], [1], [0, 0, 1, 1], [], []>} : vector<8x128xf32>, vector<128x256xf32>, vector<8x256xf32> -> vector<8x256xf32>
    %112 = arith.addf %108, %111 : vector<8x256xf32>
    %c2_94 = arith.constant 2 : index
    %c0_95 = arith.constant 0 : index
    %c0_96 = arith.constant 0 : index
    %113 = vector.load %arg4[%c2_94, %c0_95, %c0_96] : memref<3x128x256xf32, #tpu.memory_space<vmem>>, vector<1x128x256xf32>
    %114 = vector.shape_cast %113 : vector<1x128x256xf32> to vector<128x256xf32>
    %cst_97 = arith.constant dense<0.000000e+00> : vector<8x256xf32>
    %115 = tpu.matmul %88, %114, %cst_97 {dimension_numbers = #tpu.dot_dimension_numbers<[1], [0], [0], [1], [0, 0, 1, 1], [], []>} : vector<8x128xf32>, vector<128x256xf32>, vector<8x256xf32> -> vector<8x256xf32>
    %116 = arith.addf %112, %115 : vector<8x256xf32>
    %c0_98 = arith.constant 0 : index
    %c0_99 = arith.constant 0 : index
    %c0_100 = arith.constant 0 : index
    %117 = vector.load %arg4[%c0_98, %c0_99, %c0_100] : memref<3x128x256xf32, #tpu.memory_space<vmem>>, vector<1x128x256xf32>
    %118 = vector.shape_cast %117 : vector<1x128x256xf32> to vector<128x256xf32>
    %cst_101 = arith.constant dense<0.000000e+00> : vector<8x256xf32>
    %119 = tpu.matmul %83, %118, %cst_101 {dimension_numbers = #tpu.dot_dimension_numbers<[1], [0], [0], [1], [0, 0, 1, 1], [], []>} : vector<8x128xf32>, vector<128x256xf32>, vector<8x256xf32> -> vector<8x256xf32>
    %120 = vector.broadcast %103 : vector<1x256xf32> to vector<8x256xf32>
    %121 = arith.addf %120, %119 : vector<8x256xf32>
    %c1_102 = arith.constant 1 : index
    %c0_103 = arith.constant 0 : index
    %c0_104 = arith.constant 0 : index
    %122 = vector.load %arg4[%c1_102, %c0_103, %c0_104] : memref<3x128x256xf32, #tpu.memory_space<vmem>>, vector<1x128x256xf32>
    %123 = vector.shape_cast %122 : vector<1x128x256xf32> to vector<128x256xf32>
    %cst_105 = arith.constant dense<0.000000e+00> : vector<8x256xf32>
    %124 = tpu.matmul %88, %123, %cst_105 {dimension_numbers = #tpu.dot_dimension_numbers<[1], [0], [0], [1], [0, 0, 1, 1], [], []>} : vector<8x128xf32>, vector<128x256xf32>, vector<8x256xf32> -> vector<8x256xf32>
    %125 = arith.addf %121, %124 : vector<8x256xf32>
    %c2_106 = arith.constant 2 : index
    %c0_107 = arith.constant 0 : index
    %c0_108 = arith.constant 0 : index
    %126 = vector.load %arg4[%c2_106, %c0_107, %c0_108] : memref<3x128x256xf32, #tpu.memory_space<vmem>>, vector<1x128x256xf32>
    %127 = vector.shape_cast %126 : vector<1x128x256xf32> to vector<128x256xf32>
    %cst_109 = arith.constant dense<0.000000e+00> : vector<8x256xf32>
    %128 = tpu.matmul %102, %127, %cst_109 {dimension_numbers = #tpu.dot_dimension_numbers<[1], [0], [0], [1], [0, 0, 1, 1], [], []>} : vector<8x128xf32>, vector<128x256xf32>, vector<8x256xf32> -> vector<8x256xf32>
    %129 = arith.addf %125, %128 : vector<8x256xf32>
    %130 = arith.maximumf %116, %129 : vector<8x256xf32>
    %131 = vector.extract_strided_slice %130 {offsets = [0, 0], sizes = [8, 128], strides = [1, 1]} : vector<8x256xf32> to vector<8x128xf32>
    %132 = vector.extract_strided_slice %130 {offsets = [0, 128], sizes = [8, 128], strides = [1, 1]} : vector<8x256xf32> to vector<8x128xf32>
    %133 = arith.maximumf %131, %132 : vector<8x128xf32>
    %cst_110 = arith.constant 0.000000e+00 : f32
    %134 = vector.broadcast %cst_110 : f32 to vector<8x128xf32>
    %135 = arith.maximumf %133, %134 : vector<8x128xf32>
    %c0_111 = arith.constant 0 : index
    %c0_112 = arith.constant 0 : index
    %136 = vector.load %arg9[%c0_111, %c0_112] : memref<8x128xf32, #tpu.memory_space<vmem>>, vector<8x128xf32>
    tpu.vector_store %arg9[%c0_111, %c0_112], %135 {strides = array<i32>} : memref<8x128xf32, #tpu.memory_space<vmem>>, vector<8x128xf32>,
    %c0_113 = arith.constant 0 : index
    %c0_114 = arith.constant 0 : index
    %137 = vector.load %arg7[%c0_113, %c0_114] : memref<1x128xf32, #tpu.memory_space<vmem>>, vector<1x128xf32>
    %c0_115 = arith.constant 0 : index
    %c0_116 = arith.constant 0 : index
    %138 = vector.load %arg9[%c0_115, %c0_116] : memref<8x128xf32, #tpu.memory_space<vmem>>, vector<2x128xf32>
    %c0_117 = arith.constant 0 : index
    %c0_118 = arith.constant 0 : index
    %c0_119 = arith.constant 0 : index
    %139 = vector.load %arg6[%c0_117, %c0_118, %c0_119] : memref<4x128x128xf32, #tpu.memory_space<vmem>>, vector<1x128x128xf32>
    %140 = vector.shape_cast %139 : vector<1x128x128xf32> to vector<128x128xf32>
    %cst_120 = arith.constant dense<0.000000e+00> : vector<2x128xf32>
    %141 = tpu.matmul %138, %140, %cst_120 {dimension_numbers = #tpu.dot_dimension_numbers<[1], [0], [0], [1], [0, 0, 1, 1], [], []>} : vector<2x128xf32>, vector<128x128xf32>, vector<2x128xf32> -> vector<2x128xf32>
    %142 = vector.broadcast %137 : vector<1x128xf32> to vector<2x128xf32>
    %143 = arith.addf %142, %141 : vector<2x128xf32>
    %c2_121 = arith.constant 2 : index
    %c0_122 = arith.constant 0 : index
    %144 = vector.load %arg9[%c2_121, %c0_122] : memref<8x128xf32, #tpu.memory_space<vmem>>, vector<2x128xf32>
    %c1_123 = arith.constant 1 : index
    %c0_124 = arith.constant 0 : index
    %c0_125 = arith.constant 0 : index
    %145 = vector.load %arg6[%c1_123, %c0_124, %c0_125] : memref<4x128x128xf32, #tpu.memory_space<vmem>>, vector<1x128x128xf32>
    %146 = vector.shape_cast %145 : vector<1x128x128xf32> to vector<128x128xf32>
    %cst_126 = arith.constant dense<0.000000e+00> : vector<2x128xf32>
    %147 = tpu.matmul %144, %146, %cst_126 {dimension_numbers = #tpu.dot_dimension_numbers<[1], [0], [0], [1], [0, 0, 1, 1], [], []>} : vector<2x128xf32>, vector<128x128xf32>, vector<2x128xf32> -> vector<2x128xf32>
    %148 = arith.addf %143, %147 : vector<2x128xf32>
    %c4_127 = arith.constant 4 : index
    %c0_128 = arith.constant 0 : index
    %149 = vector.load %arg9[%c4_127, %c0_128] : memref<8x128xf32, #tpu.memory_space<vmem>>, vector<2x128xf32>
    %c2_129 = arith.constant 2 : index
    %c0_130 = arith.constant 0 : index
    %c0_131 = arith.constant 0 : index
    %150 = vector.load %arg6[%c2_129, %c0_130, %c0_131] : memref<4x128x128xf32, #tpu.memory_space<vmem>>, vector<1x128x128xf32>
    %151 = vector.shape_cast %150 : vector<1x128x128xf32> to vector<128x128xf32>
    %cst_132 = arith.constant dense<0.000000e+00> : vector<2x128xf32>
    %152 = tpu.matmul %149, %151, %cst_132 {dimension_numbers = #tpu.dot_dimension_numbers<[1], [0], [0], [1], [0, 0, 1, 1], [], []>} : vector<2x128xf32>, vector<128x128xf32>, vector<2x128xf32> -> vector<2x128xf32>
    %153 = arith.addf %148, %152 : vector<2x128xf32>
    %c6 = arith.constant 6 : index
    %c0_133 = arith.constant 0 : index
    %154 = vector.load %arg9[%c6, %c0_133] : memref<8x128xf32, #tpu.memory_space<vmem>>, vector<2x128xf32>
    %c3_134 = arith.constant 3 : index
    %c0_135 = arith.constant 0 : index
    %c0_136 = arith.constant 0 : index
    %155 = vector.load %arg6[%c3_134, %c0_135, %c0_136] : memref<4x128x128xf32, #tpu.memory_space<vmem>>, vector<1x128x128xf32>
    %156 = vector.shape_cast %155 : vector<1x128x128xf32> to vector<128x128xf32>
    %cst_137 = arith.constant dense<0.000000e+00> : vector<2x128xf32>
    %157 = tpu.matmul %154, %156, %cst_137 {dimension_numbers = #tpu.dot_dimension_numbers<[1], [0], [0], [1], [0, 0, 1, 1], [], []>} : vector<2x128xf32>, vector<128x128xf32>, vector<2x128xf32> -> vector<2x128xf32>
    %158 = arith.addf %153, %157 : vector<2x128xf32>
    %c0_138 = arith.constant 0 : index
    %c0_139 = arith.constant 0 : index
    %159 = vector.load %arg8[%c0_138, %c0_139] : memref<2x128xf32, #tpu.memory_space<vmem>>, vector<2x128xf32>
    tpu.vector_store %arg8[%c0_138, %c0_139], %158 {strides = array<i32>} : memref<2x128xf32, #tpu.memory_space<vmem>>, vector<2x128xf32>,
    return
  }
  func.func @transform_0(%arg0: i32) -> (i32, i32, i32) {
    %c0_i32 = arith.constant 0 : i32
    %c0_i32_0 = arith.constant 0 : i32
    %c0_i32_1 = arith.constant 0 : i32
    %c0_i32_2 = arith.constant 0 : i32
    return %c0_i32, %c0_i32_0, %c0_i32_1 : i32, i32, i32
  }
  func.func @transform_1(%arg0: i32) -> (i32, i32, i32) {
    %c0_i32 = arith.constant 0 : i32
    %c0_i32_0 = arith.constant 0 : i32
    %c0_i32_1 = arith.constant 0 : i32
    %c0_i32_2 = arith.constant 0 : i32
    return %c0_i32, %c0_i32_0, %c0_i32_1 : i32, i32, i32
  }
  func.func @transform_2(%arg0: i32) -> (i32, i32) {
    %c0_i32 = arith.constant 0 : i32
    %c0_i32_0 = arith.constant 0 : i32
    %c0_i32_1 = arith.constant 0 : i32
    return %c0_i32, %c0_i32_0 : i32, i32
  }
  func.func @transform_3(%arg0: i32) -> (i32, i32, i32) {
    %c0_i32 = arith.constant 0 : i32
    %c0_i32_0 = arith.constant 0 : i32
    %c0_i32_1 = arith.constant 0 : i32
    %c0_i32_2 = arith.constant 0 : i32
    return %c0_i32, %c0_i32_0, %c0_i32_1 : i32, i32, i32
  }
  func.func @transform_4(%arg0: i32) -> (i32, i32) {
    %c0_i32 = arith.constant 0 : i32
    %c0_i32_0 = arith.constant 0 : i32
    %c0_i32_1 = arith.constant 0 : i32
    return %c0_i32, %c0_i32_0 : i32, i32
  }
  func.func @transform_5(%arg0: i32) -> (i32, i32, i32) {
    %c0_i32 = arith.constant 0 : i32
    %c0_i32_0 = arith.constant 0 : i32
    %c0_i32_1 = arith.constant 0 : i32
    %c0_i32_2 = arith.constant 0 : i32
    return %c0_i32, %c0_i32_0, %c0_i32_1 : i32, i32, i32
  }
  func.func @transform_6(%arg0: i32) -> (i32, i32) {
    %c0_i32 = arith.constant 0 : i32
    %c0_i32_0 = arith.constant 0 : i32
    %c0_i32_1 = arith.constant 0 : i32
    return %c0_i32, %c0_i32_0 : i32, i32
  }
  func.func @transform_7(%arg0: i32) -> (i32, i32) {
    %c0_i32 = arith.constant 0 : i32
    %c0_i32_0 = arith.constant 0 : i32
    %c0_i32_1 = arith.constant 0 : i32
    return %c0_i32, %c0_i32_0 : i32, i32
  }
}

</mosaic_0001>

<llo_original>
// kernel: convnet_forward.1
$region0: #{convnet_forward.1}
  #allocation0 [shape = 'u32[]', space=smem, size = 0x4, offset = 0x4, fixed_abs, tag = 'smem constant byte address 0x4 - core index']
  #allocation1 [shape = 'u32[144,128]{1,0:T(1,128)}', space=vmem, size = 0x12000, scoped, tag = 'internal scratch']
  #allocation2 [shape = 'f32[8,128]{1,0:T(8,128)}', space=vmem, size = 0x1000, scoped, tag = 'scratch operand']
  %s0 = inlined_call_operand.vmem [shape: f32[6,8,48], index: 0, kind: input, shape index: {}]
  %s1 = inlined_call_operand.vmem [shape: f32[3,48,256], index: 1, kind: input, shape index: {}]
  %s2 = inlined_call_operand.vmem [shape: f32[1,256], index: 2, kind: input, shape index: {}]
  %s3 = inlined_call_operand.vmem [shape: f32[3,128,256], index: 3, kind: input, shape index: {}]
  %s4 = inlined_call_operand.vmem [shape: f32[1,256], index: 4, kind: input, shape index: {}]
  %s5 = inlined_call_operand.vmem [shape: f32[4,128,128], index: 5, kind: input, shape index: {}]
  %s6 = inlined_call_operand.vmem [shape: f32[1,128], index: 6, kind: input, shape index: {}]
  %s7 = inlined_call_operand.hbm [shape: f32[2,128], index: 7, kind: output, shape index: {}]
  %s8 = sld [smem:[#allocation0]]
  $region38: #{convnet_forward.1} parent=0
    _
  %s10 = ssub.s32 1, %s8
  %s11 = scalar_select 0, %s10, %s8
  $region1: #{convnet_forward.1} parent=0
    #allocation3 [shape = 'u8[1024]{0}', space=vmem, size = 0x400, scoped, tag = 'output window, operand 0, single buffered']
    #allocation4 [shape = 's32[1]{0}', space=sflag, size = 0x4, scoped, tag = 'scoped memory for convnet_forward.1']
    %12 = vsyncpa [#allocation4], 0
    // Predicated region
    $region2: #{convnet_forward.1} parent=1 // pred_check
      _
    $region3: #{convnet_forward.1} parent=1 // pred_check_branch
      %14 = sbr.rel (0) target = $region5
    $region4: #{convnet_forward.1} parent=1 // pred_region
      _
    $region5: #{convnet_forward.1} parent=1 // pred_fallthru
      _
    // Predicated region
    $region6: #{convnet_forward.1} parent=1 // pred_check
      _
    $region7: #{convnet_forward.1} parent=1 // pred_check_branch
      %16 = sbr.rel (0) target = $region9
    $region8: #{convnet_forward.1} parent=1 // pred_region
      _
    $region9: #{convnet_forward.1} parent=1 // pred_fallthru
      _
    // Predicated region
    $region10: #{convnet_forward.1} parent=1 // pred_check
      _
    $region11: #{convnet_forward.1} parent=1 // pred_check_branch
      %18 = sbr.rel (0) target = $region13
    $region12: #{convnet_forward.1} parent=1 // pred_region
      _
    $region13: #{convnet_forward.1} parent=1 // pred_fallthru
      _
    // Predicated region
    $region14: #{convnet_forward.1} parent=1 // pred_check
      _
    $region15: #{convnet_forward.1} parent=1 // pred_check_branch
      %20 = sbr.rel (0) target = $region17
    $region16: #{convnet_forward.1} parent=1 // pred_region
      _
    $region17: #{convnet_forward.1} parent=1 // pred_fallthru
      _
    // Predicated region
    $region18: #{convnet_forward.1} parent=1 // pred_check
      _
    $region19: #{convnet_forward.1} parent=1 // pred_check_branch
      %22 = sbr.rel (0) target = $region21
    $region20: #{convnet_forward.1} parent=1 // pred_region
      _
    $region21: #{convnet_forward.1} parent=1 // pred_fallthru
      _
    // Predicated region
    $region22: #{convnet_forward.1} parent=1 // pred_check
      _
    $region23: #{convnet_forward.1} parent=1 // pred_check_branch
      %24 = sbr.rel (0) target = $region25
    $region24: #{convnet_forward.1} parent=1 // pred_region
      _
    $region25: #{convnet_forward.1} parent=1 // pred_fallthru
      _
    // Predicated region
    $region26: #{convnet_forward.1} parent=1 // pred_check
      _
    $region27: #{convnet_forward.1} parent=1 // pred_check_branch
      %26 = sbr.rel (0) target = $region29
    $region28: #{convnet_forward.1} parent=1 // pred_region
      _
    $region29: #{convnet_forward.1} parent=1 // pred_fallthru
      _
    %v27 = vld [vmem:[%s2] sm:$0x3]
    %v28 = vld [vmem:[%s0] sm:$0xff]
    %v29 = vld [vmem:[%s1] sm:$0xff]
    %v30 = vld [vmem:[%s1 + $0x8] sm:$0xff]
    %v31 = vld [vmem:[%s1 + $0x10] sm:$0xff]
    %v32 = vld [vmem:[%s1 + $0x18] sm:$0xff]
    %v33 = vld [vmem:[%s1 + $0x20] sm:$0xff]
    %v34 = vld [vmem:[%s1 + $0x28] sm:$0xff]
    %v35 = vld [vmem:[%s1 + $0x30] sm:$0xff]
    %v36 = vld [vmem:[%s1 + $0x38] sm:$0xff]
    %v37 = vld [vmem:[%s1 + $0x40] sm:$0xff]
    %v38 = vld [vmem:[%s1 + $0x48] sm:$0xff]
    %v39 = vld [vmem:[%s1 + $0x50] sm:$0xff]
    %v40 = vld [vmem:[%s1 + $0x58] sm:$0xff]
    %vm41 = vcmask 392192
    %v43 = vsel %vm41, %v28, 0
    %45 = vmatprep.subr.mxu0 0.0
    %46 = vmatpush1.msra.mxu0 0.0
    %47 = vmatprep.subr.mxu0 0.0
    %48 = vmatpush1.msra.mxu0 0.0
    %49 = vmatprep.subr.mxu0 0.0
    %50 = vmatpush1.msra.mxu0 0.0
    %51 = vmatprep.subr.mxu0 0.0
    %52 = vmatpush1.msra.mxu0 0.0
    %53 = vmatprep.subr.mxu0 0.0
    %54 = vmatpush1.msra.mxu0 0.0
    %55 = vmatprep.subr.mxu0 0.0
    %56 = vmatpush1.msra.mxu0 0.0
    %57 = vmatprep.subr.mxu0 0.0
    %58 = vmatpush1.msra.mxu0 0.0
    %59 = vmatprep.subr.mxu0 0.0
    %60 = vmatpush1.msra.mxu0 0.0
    %61 = vmatprep.subr.mxu0 0.0
    %62 = vmatpush1.msra.mxu0 0.0
    %63 = vmatprep.subr.mxu0 0.0
    %64 = vmatpush1.msra.mxu0 0.0
    %65 = vmatprep.subr.mxu0 %v40
    %66 = vmatpush1.msra.mxu0 %v39
    %67 = vmatprep.subr.mxu0 %v38
    %68 = vmatpush1.msra.mxu0 %v37
    %69 = vmatprep.subr.mxu0 %v36
    %70 = vmatpush1.msra.mxu0 %v35
    %71 = vmatprep.subr.mxu0 %v34
    %72 = vmatpush1.msra.mxu0 %v33
    %73 = vmatprep.subr.mxu0 %v32
    %74 = vmatpush1.msra.mxu0 %v31
    %75 = vmatprep.subr.mxu0 %v30
    %76 = vmatpush1.msra.mxu0 %v29
    %77 = vmatprep.subr.mxu0 0.0
    %78 = vmatpush2.msra.mxu0 0.0
    %79 = vmatprep.subr.mxu0 0.0
    %80 = vmatpush2.msra.mxu0 0.0
    %81 = vmatprep.subr.mxu0 0.0
    %82 = vmatpush2.msra.mxu0 0.0
    %83 = vmatprep.subr.mxu0 0.0
    %84 = vmatpush2.msra.mxu0 0.0
    %85 = vmatprep.subr.mxu0 0.0
    %86 = vmatpush2.msra.mxu0 0.0
    %87 = vmatprep.subr.mxu0 0.0
    %88 = vmatpush2.msra.mxu0 0.0
    %89 = vmatprep.subr.mxu0 0.0
    %90 = vmatpush2.msra.mxu0 0.0
    %91 = vmatprep.subr.mxu0 0.0
    %92 = vmatpush2.msra.mxu0 0.0
    %93 = vmatprep.subr.mxu0 0.0
    %94 = vmatpush2.msra.mxu0 0.0
    %95 = vmatprep.subr.mxu0 0.0
    %96 = vmatpush2.msra.mxu0 0.0
    %97 = vmatprep.subr.mxu0 0.0
    %98 = vmatpush2.msra.mxu0 0.0
    %99 = vmatprep.subr.mxu0 0.0
    %100 = vmatpush2.msra.mxu0 0.0
    %101 = vmatprep.subr.mxu0 0.0
    %102 = vmatpush2.msra.mxu0 0.0
    %103 = vmatprep.subr.mxu0 0.0
    %104 = vmatpush2.msra.mxu0 0.0
    %105 = vmatprep.subr.mxu0 0.0
    %106 = vmatpush2.msra.mxu0 0.0
    %107 = vmatprep.subr.mxu0 0.0
    %108 = vmatpush2.msra.mxu0 0.0
    %109 = vmatprep.mubr.f32.mxu0 0.0
    %110 = vmatmul.mubr.f32.gmra.mxu0 %v43
    %v111 = vpop.f32.mrf.mxu0
    %v112 = vadd.f32 0.0, %v111
    %v113 = vpop.f32.mrf.mxu0
    %v114 = vadd.f32 0.0, %v113
    %115 = vdwg.mxu0
    %v117 = vlaneseq
    %v118 = vshrl.u32 %v117, 7
    %v119 = vsub.s32 0, %v118
    %v120 = vrot.slane %v27, %v119
    %v121 = vlaneseq
    %v122 = vshrl.u32 %v121, 7
    %v123 = vsub.s32 1, %v122
    %v124 = vrot.slane %v27, %v123
    %v127 = vadd.f32 %v120, %v112
    %v128 = vadd.f32 %v124, %v114
    %s129 = scalar_lea.vmem %s0, 8
    %v130 = vld [vmem:[%s129] sm:$0xff]
    %s131 = scalar_lea.vmem %s1, 96
    %v132 = vld [vmem:[%s131] sm:$0xff]
    %v133 = vld [vmem:[%s131 + $0x8] sm:$0xff]
    %v134 = vld [vmem:[%s131 + $0x10] sm:$0xff]
    %v135 = vld [vmem:[%s131 + $0x18] sm:$0xff]
    %v136 = vld [vmem:[%s131 + $0x20] sm:$0xff]
    %v137 = vld [vmem:[%s131 + $0x28] sm:$0xff]
    %v138 = vld [vmem:[%s131 + $0x30] sm:$0xff]
    %v139 = vld [vmem:[%s131 + $0x38] sm:$0xff]
    %v140 = vld [vmem:[%s131 + $0x40] sm:$0xff]
    %v141 = vld [vmem:[%s131 + $0x48] sm:$0xff]
    %v142 = vld [vmem:[%s131 + $0x50] sm:$0xff]
    %v143 = vld [vmem:[%s131 + $0x58] sm:$0xff]
    %v145 = vsel %vm41, %v130, 0
    %147 = vmatprep.subr.mxu0 0.0
    %148 = vmatpush1.msra.mxu0 0.0
    %149 = vmatprep.subr.mxu0 0.0
    %150 = vmatpush1.msra.mxu0 0.0
    %151 = vmatprep.subr.mxu0 0.0
    %152 = vmatpush1.msra.mxu0 0.0
    %153 = vmatprep.subr.mxu0 0.0
    %154 = vmatpush1.msra.mxu0 0.0
    %155 = vmatprep.subr.mxu0 0.0
    %156 = vmatpush1.msra.mxu0 0.0
    %157 = vmatprep.subr.mxu0 0.0
    %158 = vmatpush1.msra.mxu0 0.0
    %159 = vmatprep.subr.mxu0 0.0
    %160 = vmatpush1.msra.mxu0 0.0
    %161 = vmatprep.subr.mxu0 0.0
    %162 = vmatpush1.msra.mxu0 0.0
    %163 = vmatprep.subr.mxu0 0.0
    %164 = vmatpush1.msra.mxu0 0.0
    %165 = vmatprep.subr.mxu0 0.0
    %166 = vmatpush1.msra.mxu0 0.0
    %167 = vmatprep.subr.mxu0 %v143
    %168 = vmatpush1.msra.mxu0 %v142
    %169 = vmatprep.subr.mxu0 %v141
    %170 = vmatpush1.msra.mxu0 %v140
    %171 = vmatprep.subr.mxu0 %v139
    %172 = vmatpush1.msra.mxu0 %v138
    %173 = vmatprep.subr.mxu0 %v137
    %174 = vmatpush1.msra.mxu0 %v136
    %175 = vmatprep.subr.mxu0 %v135
    %176 = vmatpush1.msra.mxu0 %v134
    %177 = vmatprep.subr.mxu0 %v133
    %178 = vmatpush1.msra.mxu0 %v132
    %179 = vmatprep.subr.mxu0 0.0
    %180 = vmatpush2.msra.mxu0 0.0
    %181 = vmatprep.subr.mxu0 0.0
    %182 = vmatpush2.msra.mxu0 0.0
    %183 = vmatprep.subr.mxu0 0.0
    %184 = vmatpush2.msra.mxu0 0.0
    %185 = vmatprep.subr.mxu0 0.0
    %186 = vmatpush2.msra.mxu0 0.0
    %187 = vmatprep.subr.mxu0 0.0
    %188 = vmatpush2.msra.mxu0 0.0
    %189 = vmatprep.subr.mxu0 0.0
    %190 = vmatpush2.msra.mxu0 0.0
    %191 = vmatprep.subr.mxu0 0.0
    %192 = vmatpush2.msra.mxu0 0.0
    %193 = vmatprep.subr.mxu0 0.0
    %194 = vmatpush2.msra.mxu0 0.0
    %195 = vmatprep.subr.mxu0 0.0
    %196 = vmatpush2.msra.mxu0 0.0
    %197 = vmatprep.subr.mxu0 0.0
    %198 = vmatpush2.msra.mxu0 0.0
    %199 = vmatprep.subr.mxu0 0.0
    %200 = vmatpush2.msra.mxu0 0.0
    %201 = vmatprep.subr.mxu0 0.0
    %202 = vmatpush2.msra.mxu0 0.0
    %203 = vmatprep.subr.mxu0 0.0
    %204 = vmatpush2.msra.mxu0 0.0
    %205 = vmatprep.subr.mxu0 0.0
    %206 = vmatpush2.msra.mxu0 0.0
    %207 = vmatprep.subr.mxu0 0.0
    %208 = vmatpush2.msra.mxu0 0.0
    %209 = vmatprep.subr.mxu0 0.0
    %210 = vmatpush2.msra.mxu0 0.0
    %211 = vmatprep.mubr.f32.mxu0 0.0
    %212 = vmatmul.mubr.f32.gmra.mxu0 %v145
    %v213 = vpop.f32.mrf.mxu0
    %v214 = vadd.f32 0.0, %v213
    %v215 = vpop.f32.mrf.mxu0
    %v216 = vadd.f32 0.0, %v215
    %217 = vdwg.mxu0
    %v218 = vadd.f32 %v127, %v214
    %v219 = vadd.f32 %v128, %v216
    %s220 = scalar_lea.vmem %s0, 16
    %v221 = vld [vmem:[%s220] sm:$0xff]
    %s222 = scalar_lea.vmem %s1, 192
    %v223 = vld [vmem:[%s222] sm:$0xff]
    %v224 = vld [vmem:[%s222 + $0x8] sm:$0xff]
    %v225 = vld [vmem:[%s222 + $0x10] sm:$0xff]
    %v226 = vld [vmem:[%s222 + $0x18] sm:$0xff]
    %v227 = vld [vmem:[%s222 + $0x20] sm:$0xff]
    %v228 = vld [vmem:[%s222 + $0x28] sm:$0xff]
    %v229 = vld [vmem:[%s222 + $0x30] sm:$0xff]
    %v230 = vld [vmem:[%s222 + $0x38] sm:$0xff]
    %v231 = vld [vmem:[%s222 + $0x40] sm:$0xff]
    %v232 = vld [vmem:[%s222 + $0x48] sm:$0xff]
    %v233 = vld [vmem:[%s222 + $0x50] sm:$0xff]
    %v234 = vld [vmem:[%s222 + $0x58] sm:$0xff]
    %v236 = vsel %vm41, %v221, 0
    %238 = vmatprep.subr.mxu0 0.0
    %239 = vmatpush1.msra.mxu0 0.0
    %240 = vmatprep.subr.mxu0 0.0
    %241 = vmatpush1.msra.mxu0 0.0
    %242 = vmatprep.subr.mxu0 0.0
    %243 = vmatpush1.msra.mxu0 0.0
    %244 = vmatprep.subr.mxu0 0.0
    %245 = vmatpush1.msra.mxu0 0.0
    %246 = vmatprep.subr.mxu0 0.0
    %247 = vmatpush1.msra.mxu0 0.0
    %248 = vmatprep.subr.mxu0 0.0
    %249 = vmatpush1.msra.mxu0 0.0
    %250 = vmatprep.subr.mxu0 0.0
    %251 = vmatpush1.msra.mxu0 0.0
    %252 = vmatprep.subr.mxu0 0.0
    %253 = vmatpush1.msra.mxu0 0.0
    %254 = vmatprep.subr.mxu0 0.0
    %255 = vmatpush1.msra.mxu0 0.0
    %256 = vmatprep.subr.mxu0 0.0
    %257 = vmatpush1.msra.mxu0 0.0
    %258 = vmatprep.subr.mxu0 %v234
    %259 = vmatpush1.msra.mxu0 %v233
    %260 = vmatprep.subr.mxu0 %v232
    %261 = vmatpush1.msra.mxu0 %v231
    %262 = vmatprep.subr.mxu0 %v230
    %263 = vmatpush1.msra.mxu0 %v229
    %264 = vmatprep.subr.mxu0 %v228
    %265 = vmatpush1.msra.mxu0 %v227
    %266 = vmatprep.subr.mxu0 %v226
    %267 = vmatpush1.msra.mxu0 %v225
    %268 = vmatprep.subr.mxu0 %v224
    %269 = vmatpush1.msra.mxu0 %v223
    %270 = vmatprep.subr.mxu0 0.0
    %271 = vmatpush2.msra.mxu0 0.0
    %272 = vmatprep.subr.mxu0 0.0
    %273 = vmatpush2.msra.mxu0 0.0
    %274 = vmatprep.subr.mxu0 0.0
    %275 = vmatpush2.msra.mxu0 0.0
    %276 = vmatprep.subr.mxu0 0.0
    %277 = vmatpush2.msra.mxu0 0.0
    %278 = vmatprep.subr.mxu0 0.0
    %279 = vmatpush2.msra.mxu0 0.0
    %280 = vmatprep.subr.mxu0 0.0
    %281 = vmatpush2.msra.mxu0 0.0
    %282 = vmatprep.subr.mxu0 0.0
    %283 = vmatpush2.msra.mxu0 0.0
    %284 = vmatprep.subr.mxu0 0.0
    %285 = vmatpush2.msra.mxu0 0.0
    %286 = vmatprep.subr.mxu0 0.0
    %287 = vmatpush2.msra.mxu0 0.0
    %288 = vmatprep.subr.mxu0 0.0
    %289 = vmatpush2.msra.mxu0 0.0
    %290 = vmatprep.subr.mxu0 0.0
    %291 = vmatpush2.msra.mxu0 0.0
    %292 = vmatprep.subr.mxu0 0.0
    %293 = vmatpush2.msra.mxu0 0.0
    %294 = vmatprep.subr.mxu0 0.0
    %295 = vmatpush2.msra.mxu0 0.0
    %296 = vmatprep.subr.mxu0 0.0
    %297 = vmatpush2.msra.mxu0 0.0
    %298 = vmatprep.subr.mxu0 0.0
    %299 = vmatpush2.msra.mxu0 0.0
    %300 = vmatprep.subr.mxu0 0.0
    %301 = vmatpush2.msra.mxu0 0.0
    %302 = vmatprep.mubr.f32.mxu0 0.0
    %303 = vmatmul.mubr.f32.gmra.mxu0 %v236
    %v304 = vpop.f32.mrf.mxu0
    %v305 = vadd.f32 0.0, %v304
    %v306 = vpop.f32.mrf.mxu0
    %v307 = vadd.f32 0.0, %v306
    %308 = vdwg.mxu0
    %v309 = vadd.f32 %v218, %v305
    %v310 = vadd.f32 %v219, %v307
    %311 = vmatprep.subr.mxu0 0.0
    %312 = vmatpush1.msra.mxu0 0.0
    %313 = vmatprep.subr.mxu0 0.0
    %314 = vmatpush1.msra.mxu0 0.0
    %315 = vmatprep.subr.mxu0 0.0
    %316 = vmatpush1.msra.mxu0 0.0
    %317 = vmatprep.subr.mxu0 0.0
    %318 = vmatpush1.msra.mxu0 0.0
    %319 = vmatprep.subr.mxu0 0.0
    %320 = vmatpush1.msra.mxu0 0.0
    %321 = vmatprep.subr.mxu0 0.0
    %322 = vmatpush1.msra.mxu0 0.0
    %323 = vmatprep.subr.mxu0 0.0
    %324 = vmatpush1.msra.mxu0 0.0
    %325 = vmatprep.subr.mxu0 0.0
    %326 = vmatpush1.msra.mxu0 0.0
    %327 = vmatprep.subr.mxu0 0.0
    %328 = vmatpush1.msra.mxu0 0.0
    %329 = vmatprep.subr.mxu0 0.0
    %330 = vmatpush1.msra.mxu0 0.0
    %331 = vmatprep.subr.mxu0 %v40
    %332 = vmatpush1.msra.mxu0 %v39
    %333 = vmatprep.subr.mxu0 %v38
    %334 = vmatpush1.msra.mxu0 %v37
    %335 = vmatprep.subr.mxu0 %v36
    %336 = vmatpush1.msra.mxu0 %v35
    %337 = vmatprep.subr.mxu0 %v34
    %338 = vmatpush1.msra.mxu0 %v33
    %339 = vmatprep.subr.mxu0 %v32
    %340 = vmatpush1.msra.mxu0 %v31
    %341 = vmatprep.subr.mxu0 %v30
    %342 = vmatpush1.msra.mxu0 %v29
    %343 = vmatprep.subr.mxu0 0.0
    %344 = vmatpush2.msra.mxu0 0.0
    %345 = vmatprep.subr.mxu0 0.0
    %346 = vmatpush2.msra.mxu0 0.0
    %347 = vmatprep.subr.mxu0 0.0
    %348 = vmatpush2.msra.mxu0 0.0
    %349 = vmatprep.subr.mxu0 0.0
    %350 = vmatpush2.msra.mxu0 0.0
    %351 = vmatprep.subr.mxu0 0.0
    %352 = vmatpush2.msra.mxu0 0.0
    %353 = vmatprep.subr.mxu0 0.0
    %354 = vmatpush2.msra.mxu0 0.0
    %355 = vmatprep.subr.mxu0 0.0
    %356 = vmatpush2.msra.mxu0 0.0
    %357 = vmatprep.subr.mxu0 0.0
    %358 = vmatpush2.msra.mxu0 0.0
    %359 = vmatprep.subr.mxu0 0.0
    %360 = vmatpush2.msra.mxu0 0.0
    %361 = vmatprep.subr.mxu0 0.0
    %362 = vmatpush2.msra.mxu0 0.0
    %363 = vmatprep.subr.mxu0 0.0
    %364 = vmatpush2.msra.mxu0 0.0
    %365 = vmatprep.subr.mxu0 0.0
    %366 = vmatpush2.msra.mxu0 0.0
    %367 = vmatprep.subr.mxu0 0.0
    %368 = vmatpush2.msra.mxu0 0.0
    %369 = vmatprep.subr.mxu0 0.0
    %370 = vmatpush2.msra.mxu0 0.0
    %371 = vmatprep.subr.mxu0 0.0
    %372 = vmatpush2.msra.mxu0 0.0
    %373 = vmatprep.subr.mxu0 0.0
    %374 = vmatpush2.msra.mxu0 0.0
    %375 = vmatprep.mubr.f32.mxu0 0.0
    %376 = vmatmul.mubr.f32.gmra.mxu0 %v145
    %v377 = vpop.f32.mrf.mxu0
    %v378 = vadd.f32 0.0, %v377
    %v379 = vpop.f32.mrf.mxu0
    %v380 = vadd.f32 0.0, %v379
    %381 = vdwg.mxu0
    %v382 = vadd.f32 %v120, %v378
    %v383 = vadd.f32 %v124, %v380
    %384 = vmatprep.subr.mxu0 0.0
    %385 = vmatpush1.msra.mxu0 0.0
    %386 = vmatprep.subr.mxu0 0.0
    %387 = vmatpush1.msra.mxu0 0.0
    %388 = vmatprep.subr.mxu0 0.0
    %389 = vmatpush1.msra.mxu0 0.0
    %390 = vmatprep.subr.mxu0 0.0
    %391 = vmatpush1.msra.mxu0 0.0
    %392 = vmatprep.subr.mxu0 0.0
    %393 = vmatpush1.msra.mxu0 0.0
    %394 = vmatprep.subr.mxu0 0.0
    %395 = vmatpush1.msra.mxu0 0.0
    %396 = vmatprep.subr.mxu0 0.0
    %397 = vmatpush1.msra.mxu0 0.0
    %398 = vmatprep.subr.mxu0 0.0
    %399 = vmatpush1.msra.mxu0 0.0
    %400 = vmatprep.subr.mxu0 0.0
    %401 = vmatpush1.msra.mxu0 0.0
    %402 = vmatprep.subr.mxu0 0.0
    %403 = vmatpush1.msra.mxu0 0.0
    %404 = vmatprep.subr.mxu0 %v143
    %405 = vmatpush1.msra.mxu0 %v142
    %406 = vmatprep.subr.mxu0 %v141
    %407 = vmatpush1.msra.mxu0 %v140
    %408 = vmatprep.subr.mxu0 %v139
    %409 = vmatpush1.msra.mxu0 %v138
    %410 = vmatprep.subr.mxu0 %v137
    %411 = vmatpush1.msra.mxu0 %v136
    %412 = vmatprep.subr.mxu0 %v135
    %413 = vmatpush1.msra.mxu0 %v134
    %414 = vmatprep.subr.mxu0 %v133
    %415 = vmatpush1.msra.mxu0 %v132
    %416 = vmatprep.subr.mxu0 0.0
    %417 = vmatpush2.msra.mxu0 0.0
    %418 = vmatprep.subr.mxu0 0.0
    %419 = vmatpush2.msra.mxu0 0.0
    %420 = vmatprep.subr.mxu0 0.0
    %421 = vmatpush2.msra.mxu0 0.0
    %422 = vmatprep.subr.mxu0 0.0
    %423 = vmatpush2.msra.mxu0 0.0
    %424 = vmatprep.subr.mxu0 0.0
    %425 = vmatpush2.msra.mxu0 0.0
    %426 = vmatprep.subr.mxu0 0.0
    %427 = vmatpush2.msra.mxu0 0.0
    %428 = vmatprep.subr.mxu0 0.0
    %429 = vmatpush2.msra.mxu0 0.0
    %430 = vmatprep.subr.mxu0 0.0
    %431 = vmatpush2.msra.mxu0 0.0
    %432 = vmatprep.subr.mxu0 0.0
    %433 = vmatpush2.msra.mxu0 0.0
    %434 = vmatprep.subr.mxu0 0.0
    %435 = vmatpush2.msra.mxu0 0.0
    %436 = vmatprep.subr.mxu0 0.0
    %437 = vmatpush2.msra.mxu0 0.0
    %438 = vmatprep.subr.mxu0 0.0
    %439 = vmatpush2.msra.mxu0 0.0
    %440 = vmatprep.subr.mxu0 0.0
    %441 = vmatpush2.msra.mxu0 0.0
    %442 = vmatprep.subr.mxu0 0.0
    %443 = vmatpush2.msra.mxu0 0.0
    %444 = vmatprep.subr.mxu0 0.0
    %445 = vmatpush2.msra.mxu0 0.0
    %446 = vmatprep.subr.mxu0 0.0
    %447 = vmatpush2.msra.mxu0 0.0
    %448 = vmatprep.mubr.f32.mxu0 0.0
    %449 = vmatmul.mubr.f32.gmra.mxu0 %v236
    %v450 = vpop.f32.mrf.mxu0
    %v451 = vadd.f32 0.0, %v450
    %v452 = vpop.f32.mrf.mxu0
    %v453 = vadd.f32 0.0, %v452
    %454 = vdwg.mxu0
    %v455 = vadd.f32 %v382, %v451
    %v456 = vadd.f32 %v383, %v453
    %s457 = scalar_lea.vmem %s0, 24
    %v458 = vld [vmem:[%s457] sm:$0xff]
    %v460 = vsel %vm41, %v458, 0
    %462 = vmatprep.subr.mxu0 0.0
    %463 = vmatpush1.msra.mxu0 0.0
    %464 = vmatprep.subr.mxu0 0.0
    %465 = vmatpush1.msra.mxu0 0.0
    %466 = vmatprep.subr.mxu0 0.0
    %467 = vmatpush1.msra.mxu0 0.0
    %468 = vmatprep.subr.mxu0 0.0
    %469 = vmatpush1.msra.mxu0 0.0
    %470 = vmatprep.subr.mxu0 0.0
    %471 = vmatpush1.msra.mxu0 0.0
    %472 = vmatprep.subr.mxu0 0.0
    %473 = vmatpush1.msra.mxu0 0.0
    %474 = vmatprep.subr.mxu0 0.0
    %475 = vmatpush1.msra.mxu0 0.0
    %476 = vmatprep.subr.mxu0 0.0
    %477 = vmatpush1.msra.mxu0 0.0
    %478 = vmatprep.subr.mxu0 0.0
    %479 = vmatpush1.msra.mxu0 0.0
    %480 = vmatprep.subr.mxu0 0.0
    %481 = vmatpush1.msra.mxu0 0.0
    %482 = vmatprep.subr.mxu0 %v234
    %483 = vmatpush1.msra.mxu0 %v233
    %484 = vmatprep.subr.mxu0 %v232
    %485 = vmatpush1.msra.mxu0 %v231
    %486 = vmatprep.subr.mxu0 %v230
    %487 = vmatpush1.msra.mxu0 %v229
    %488 = vmatprep.subr.mxu0 %v228
    %489 = vmatpush1.msra.mxu0 %v227
    %490 = vmatprep.subr.mxu0 %v226
    %491 = vmatpush1.msra.mxu0 %v225
    %492 = vmatprep.subr.mxu0 %v224
    %493 = vmatpush1.msra.mxu0 %v223
    %494 = vmatprep.subr.mxu0 0.0
    %495 = vmatpush2.msra.mxu0 0.0
    %496 = vmatprep.subr.mxu0 0.0
    %497 = vmatpush2.msra.mxu0 0.0
    %498 = vmatprep.subr.mxu0 0.0
    %499 = vmatpush2.msra.mxu0 0.0
    %500 = vmatprep.subr.mxu0 0.0
    %501 = vmatpush2.msra.mxu0 0.0
    %502 = vmatprep.subr.mxu0 0.0
    %503 = vmatpush2.msra.mxu0 0.0
    %504 = vmatprep.subr.mxu0 0.0
    %505 = vmatpush2.msra.mxu0 0.0
    %506 = vmatprep.subr.mxu0 0.0
    %507 = vmatpush2.msra.mxu0 0.0
    %508 = vmatprep.subr.mxu0 0.0
    %509 = vmatpush2.msra.mxu0 0.0
    %510 = vmatprep.subr.mxu0 0.0
    %511 = vmatpush2.msra.mxu0 0.0
    %512 = vmatprep.subr.mxu0 0.0
    %513 = vmatpush2.msra.mxu0 0.0
    %514 = vmatprep.subr.mxu0 0.0
    %515 = vmatpush2.msra.mxu0 0.0
    %516 = vmatprep.subr.mxu0 0.0
    %517 = vmatpush2.msra.mxu0 0.0
    %518 = vmatprep.subr.mxu0 0.0
    %519 = vmatpush2.msra.mxu0 0.0
    %520 = vmatprep.subr.mxu0 0.0
    %521 = vmatpush2.msra.mxu0 0.0
    %522 = vmatprep.subr.mxu0 0.0
    %523 = vmatpush2.msra.mxu0 0.0
    %524 = vmatprep.subr.mxu0 0.0
    %525 = vmatpush2.msra.mxu0 0.0
    %526 = vmatprep.mubr.f32.mxu0 0.0
    %527 = vmatmul.mubr.f32.gmra.mxu0 %v460
    %v528 = vpop.f32.mrf.mxu0
    %v529 = vadd.f32 0.0, %v528
    %v530 = vpop.f32.mrf.mxu0
    %v531 = vadd.f32 0.0, %v530
    %532 = vdwg.mxu0
    %v533 = vadd.f32 %v455, %v529
    %v534 = vadd.f32 %v456, %v531
    %535 = vmatprep.subr.mxu0 0.0
    %536 = vmatpush1.msra.mxu0 0.0
    %537 = vmatprep.subr.mxu0 0.0
    %538 = vmatpush1.msra.mxu0 0.0
    %539 = vmatprep.subr.mxu0 0.0
    %540 = vmatpush1.msra.mxu0 0.0
    %541 = vmatprep.subr.mxu0 0.0
    %542 = vmatpush1.msra.mxu0 0.0
    %543 = vmatprep.subr.mxu0 0.0
    %544 = vmatpush1.msra.mxu0 0.0
    %545 = vmatprep.subr.mxu0 0.0
    %546 = vmatpush1.msra.mxu0 0.0
    %547 = vmatprep.subr.mxu0 0.0
    %548 = vmatpush1.msra.mxu0 0.0
    %549 = vmatprep.subr.mxu0 0.0
    %550 = vmatpush1.msra.mxu0 0.0
    %551 = vmatprep.subr.mxu0 0.0
    %552 = vmatpush1.msra.mxu0 0.0
    %553 = vmatprep.subr.mxu0 0.0
    %554 = vmatpush1.msra.mxu0 0.0
    %555 = vmatprep.subr.mxu0 %v40
    %556 = vmatpush1.msra.mxu0 %v39
    %557 = vmatprep.subr.mxu0 %v38
    %558 = vmatpush1.msra.mxu0 %v37
    %559 = vmatprep.subr.mxu0 %v36
    %560 = vmatpush1.msra.mxu0 %v35
    %561 = vmatprep.subr.mxu0 %v34
    %562 = vmatpush1.msra.mxu0 %v33
    %563 = vmatprep.subr.mxu0 %v32
    %564 = vmatpush1.msra.mxu0 %v31
    %565 = vmatprep.subr.mxu0 %v30
    %566 = vmatpush1.msra.mxu0 %v29
    %567 = vmatprep.subr.mxu0 0.0
    %568 = vmatpush2.msra.mxu0 0.0
    %569 = vmatprep.subr.mxu0 0.0
    %570 = vmatpush2.msra.mxu0 0.0
    %571 = vmatprep.subr.mxu0 0.0
    %572 = vmatpush2.msra.mxu0 0.0
    %573 = vmatprep.subr.mxu0 0.0
    %574 = vmatpush2.msra.mxu0 0.0
    %575 = vmatprep.subr.mxu0 0.0
    %576 = vmatpush2.msra.mxu0 0.0
    %577 = vmatprep.subr.mxu0 0.0
    %578 = vmatpush2.msra.mxu0 0.0
    %579 = vmatprep.subr.mxu0 0.0
    %580 = vmatpush2.msra.mxu0 0.0
    %581 = vmatprep.subr.mxu0 0.0
    %582 = vmatpush2.msra.mxu0 0.0
    %583 = vmatprep.subr.mxu0 0.0
    %584 = vmatpush2.msra.mxu0 0.0
    %585 = vmatprep.subr.mxu0 0.0
    %586 = vmatpush2.msra.mxu0 0.0
    %587 = vmatprep.subr.mxu0 0.0
    %588 = vmatpush2.msra.mxu0 0.0
    %589 = vmatprep.subr.mxu0 0.0
    %590 = vmatpush2.msra.mxu0 0.0
    %591 = vmatprep.subr.mxu0 0.0
    %592 = vmatpush2.msra.mxu0 0.0
    %593 = vmatprep.subr.mxu0 0.0
    %594 = vmatpush2.msra.mxu0 0.0
    %595 = vmatprep.subr.mxu0 0.0
    %596 = vmatpush2.msra.mxu0 0.0
    %597 = vmatprep.subr.mxu0 0.0
    %598 = vmatpush2.msra.mxu0 0.0
    %599 = vmatprep.mubr.f32.mxu0 0.0
    %600 = vmatmul.mubr.f32.gmra.mxu0 %v236
    %v601 = vpop.f32.mrf.mxu0
    %v602 = vadd.f32 0.0, %v601
    %v603 = vpop.f32.mrf.mxu0
    %v604 = vadd.f32 0.0, %v603
    %605 = vdwg.mxu0
    %v606 = vadd.f32 %v120, %v602
    %v607 = vadd.f32 %v124, %v604
    %608 = vmatprep.subr.mxu0 0.0
    %609 = vmatpush1.msra.mxu0 0.0
    %610 = vmatprep.subr.mxu0 0.0
    %611 = vmatpush1.msra.mxu0 0.0
    %612 = vmatprep.subr.mxu0 0.0
    %613 = vmatpush1.msra.mxu0 0.0
    %614 = vmatprep.subr.mxu0 0.0
    %615 = vmatpush1.msra.mxu0 0.0
    %616 = vmatprep.subr.mxu0 0.0
    %617 = vmatpush1.msra.mxu0 0.0
    %618 = vmatprep.subr.mxu0 0.0
    %619 = vmatpush1.msra.mxu0 0.0
    %620 = vmatprep.subr.mxu0 0.0
    %621 = vmatpush1.msra.mxu0 0.0
    %622 = vmatprep.subr.mxu0 0.0
    %623 = vmatpush1.msra.mxu0 0.0
    %624 = vmatprep.subr.mxu0 0.0
    %625 = vmatpush1.msra.mxu0 0.0
    %626 = vmatprep.subr.mxu0 0.0
    %627 = vmatpush1.msra.mxu0 0.0
    %628 = vmatprep.subr.mxu0 %v143
    %629 = vmatpush1.msra.mxu0 %v142
    %630 = vmatprep.subr.mxu0 %v141
    %631 = vmatpush1.msra.mxu0 %v140
    %632 = vmatprep.subr.mxu0 %v139
    %633 = vmatpush1.msra.mxu0 %v138
    %634 = vmatprep.subr.mxu0 %v137
    %635 = vmatpush1.msra.mxu0 %v136
    %636 = vmatprep.subr.mxu0 %v135
    %637 = vmatpush1.msra.mxu0 %v134
    %638 = vmatprep.subr.mxu0 %v133
    %639 = vmatpush1.msra.mxu0 %v132
    %640 = vmatprep.subr.mxu0 0.0
    %641 = vmatpush2.msra.mxu0 0.0
    %642 = vmatprep.subr.mxu0 0.0
    %643 = vmatpush2.msra.mxu0 0.0
    %644 = vmatprep.subr.mxu0 0.0
    %645 = vmatpush2.msra.mxu0 0.0
    %646 = vmatprep.subr.mxu0 0.0
    %647 = vmatpush2.msra.mxu0 0.0
    %648 = vmatprep.subr.mxu0 0.0
    %649 = vmatpush2.msra.mxu0 0.0
    %650 = vmatprep.subr.mxu0 0.0
    %651 = vmatpush2.msra.mxu0 0.0
    %652 = vmatprep.subr.mxu0 0.0
    %653 = vmatpush2.msra.mxu0 0.0
    %654 = vmatprep.subr.mxu0 0.0
    %655 = vmatpush2.msra.mxu0 0.0
    %656 = vmatprep.subr.mxu0 0.0
    %657 = vmatpush2.msra.mxu0 0.0
    %658 = vmatprep.subr.mxu0 0.0
    %659 = vmatpush2.msra.mxu0 0.0
    %660 = vmatprep.subr.mxu0 0.0
    %661 = vmatpush2.msra.mxu0 0.0
    %662 = vmatprep.subr.mxu0 0.0
    %663 = vmatpush2.msra.mxu0 0.0
    %664 = vmatprep.subr.mxu0 0.0
    %665 = vmatpush2.msra.mxu0 0.0
    %666 = vmatprep.subr.mxu0 0.0
    %667 = vmatpush2.msra.mxu0 0.0
    %668 = vmatprep.subr.mxu0 0.0
    %669 = vmatpush2.msra.mxu0 0.0
    %670 = vmatprep.subr.mxu0 0.0
    %671 = vmatpush2.msra.mxu0 0.0
    %672 = vmatprep.mubr.f32.mxu0 0.0
    %673 = vmatmul.mubr.f32.gmra.mxu0 %v460
    %v674 = vpop.f32.mrf.mxu0
    %v675 = vadd.f32 0.0, %v674
    %v676 = vpop.f32.mrf.mxu0
    %v677 = vadd.f32 0.0, %v676
    %678 = vdwg.mxu0
    %v679 = vadd.f32 %v606, %v675
    %v680 = vadd.f32 %v607, %v677
    %s681 = scalar_lea.vmem %s0, 32
    %v682 = vld [vmem:[%s681] sm:$0xff]
    %v684 = vsel %vm41, %v682, 0
    %686 = vmatprep.subr.mxu0 0.0
    %687 = vmatpush1.msra.mxu0 0.0
    %688 = vmatprep.subr.mxu0 0.0
    %689 = vmatpush1.msra.mxu0 0.0
    %690 = vmatprep.subr.mxu0 0.0
    %691 = vmatpush1.msra.mxu0 0.0
    %692 = vmatprep.subr.mxu0 0.0
    %693 = vmatpush1.msra.mxu0 0.0
    %694 = vmatprep.subr.mxu0 0.0
    %695 = vmatpush1.msra.mxu0 0.0
    %696 = vmatprep.subr.mxu0 0.0
    %697 = vmatpush1.msra.mxu0 0.0
    %698 = vmatprep.subr.mxu0 0.0
    %699 = vmatpush1.msra.mxu0 0.0
    %700 = vmatprep.subr.mxu0 0.0
    %701 = vmatpush1.msra.mxu0 0.0
    %702 = vmatprep.subr.mxu0 0.0
    %703 = vmatpush1.msra.mxu0 0.0
    %704 = vmatprep.subr.mxu0 0.0
    %705 = vmatpush1.msra.mxu0 0.0
    %706 = vmatprep.subr.mxu0 %v234
    %707 = vmatpush1.msra.mxu0 %v233
    %708 = vmatprep.subr.mxu0 %v232
    %709 = vmatpush1.msra.mxu0 %v231
    %710 = vmatprep.subr.mxu0 %v230
    %711 = vmatpush1.msra.mxu0 %v229
    %712 = vmatprep.subr.mxu0 %v228
    %713 = vmatpush1.msra.mxu0 %v227
    %714 = vmatprep.subr.mxu0 %v226
    %715 = vmatpush1.msra.mxu0 %v225
    %716 = vmatprep.subr.mxu0 %v224
    %717 = vmatpush1.msra.mxu0 %v223
    %718 = vmatprep.subr.mxu0 0.0
    %719 = vmatpush2.msra.mxu0 0.0
    %720 = vmatprep.subr.mxu0 0.0
    %721 = vmatpush2.msra.mxu0 0.0
    %722 = vmatprep.subr.mxu0 0.0
    %723 = vmatpush2.msra.mxu0 0.0
    %724 = vmatprep.subr.mxu0 0.0
    %725 = vmatpush2.msra.mxu0 0.0
    %726 = vmatprep.subr.mxu0 0.0
    %727 = vmatpush2.msra.mxu0 0.0
    %728 = vmatprep.subr.mxu0 0.0
    %729 = vmatpush2.msra.mxu0 0.0
    %730 = vmatprep.subr.mxu0 0.0
    %731 = vmatpush2.msra.mxu0 0.0
    %732 = vmatprep.subr.mxu0 0.0
    %733 = vmatpush2.msra.mxu0 0.0
    %734 = vmatprep.subr.mxu0 0.0
    %735 = vmatpush2.msra.mxu0 0.0
    %736 = vmatprep.subr.mxu0 0.0
    %737 = vmatpush2.msra.mxu0 0.0
    %738 = vmatprep.subr.mxu0 0.0
    %739 = vmatpush2.msra.mxu0 0.0
    %740 = vmatprep.subr.mxu0 0.0
    %741 = vmatpush2.msra.mxu0 0.0
    %742 = vmatprep.subr.mxu0 0.0
    %743 = vmatpush2.msra.mxu0 0.0
    %744 = vmatprep.subr.mxu0 0.0
    %745 = vmatpush2.msra.mxu0 0.0
    %746 = vmatprep.subr.mxu0 0.0
    %747 = vmatpush2.msra.mxu0 0.0
    %748 = vmatprep.subr.mxu0 0.0
    %749 = vmatpush2.msra.mxu0 0.0
    %750 = vmatprep.mubr.f32.mxu0 0.0
    %751 = vmatmul.mubr.f32.gmra.mxu0 %v684
    %v752 = vpop.f32.mrf.mxu0
    %v753 = vadd.f32 0.0, %v752
    %v754 = vpop.f32.mrf.mxu0
    %v755 = vadd.f32 0.0, %v754
    %756 = vdwg.mxu0
    %v757 = vadd.f32 %v679, %v753
    %v758 = vadd.f32 %v680, %v755
    %759 = vmatprep.subr.mxu0 0.0
    %760 = vmatpush1.msra.mxu0 0.0
    %761 = vmatprep.subr.mxu0 0.0
    %762 = vmatpush1.msra.mxu0 0.0
    %763 = vmatprep.subr.mxu0 0.0
    %764 = vmatpush1.msra.mxu0 0.0
    %765 = vmatprep.subr.mxu0 0.0
    %766 = vmatpush1.msra.mxu0 0.0
    %767 = vmatprep.subr.mxu0 0.0
    %768 = vmatpush1.msra.mxu0 0.0
    %769 = vmatprep.subr.mxu0 0.0
    %770 = vmatpush1.msra.mxu0 0.0
    %771 = vmatprep.subr.mxu0 0.0
    %772 = vmatpush1.msra.mxu0 0.0
    %773 = vmatprep.subr.mxu0 0.0
    %774 = vmatpush1.msra.mxu0 0.0
    %775 = vmatprep.subr.mxu0 0.0
    %776 = vmatpush1.msra.mxu0 0.0
    %777 = vmatprep.subr.mxu0 0.0
    %778 = vmatpush1.msra.mxu0 0.0
    %779 = vmatprep.subr.mxu0 %v40
    %780 = vmatpush1.msra.mxu0 %v39
    %781 = vmatprep.subr.mxu0 %v38
    %782 = vmatpush1.msra.mxu0 %v37
    %783 = vmatprep.subr.mxu0 %v36
    %784 = vmatpush1.msra.mxu0 %v35
    %785 = vmatprep.subr.mxu0 %v34
    %786 = vmatpush1.msra.mxu0 %v33
    %787 = vmatprep.subr.mxu0 %v32
    %788 = vmatpush1.msra.mxu0 %v31
    %789 = vmatprep.subr.mxu0 %v30
    %790 = vmatpush1.msra.mxu0 %v29
    %791 = vmatprep.subr.mxu0 0.0
    %792 = vmatpush2.msra.mxu0 0.0
    %793 = vmatprep.subr.mxu0 0.0
    %794 = vmatpush2.msra.mxu0 0.0
    %795 = vmatprep.subr.mxu0 0.0
    %796 = vmatpush2.msra.mxu0 0.0
    %797 = vmatprep.subr.mxu0 0.0
    %798 = vmatpush2.msra.mxu0 0.0
    %799 = vmatprep.subr.mxu0 0.0
    %800 = vmatpush2.msra.mxu0 0.0
    %801 = vmatprep.subr.mxu0 0.0
    %802 = vmatpush2.msra.mxu0 0.0
    %803 = vmatprep.subr.mxu0 0.0
    %804 = vmatpush2.msra.mxu0 0.0
    %805 = vmatprep.subr.mxu0 0.0
    %806 = vmatpush2.msra.mxu0 0.0
    %807 = vmatprep.subr.mxu0 0.0
    %808 = vmatpush2.msra.mxu0 0.0
    %809 = vmatprep.subr.mxu0 0.0
    %810 = vmatpush2.msra.mxu0 0.0
    %811 = vmatprep.subr.mxu0 0.0
    %812 = vmatpush2.msra.mxu0 0.0
    %813 = vmatprep.subr.mxu0 0.0
    %814 = vmatpush2.msra.mxu0 0.0
    %815 = vmatprep.subr.mxu0 0.0
    %816 = vmatpush2.msra.mxu0 0.0
    %817 = vmatprep.subr.mxu0 0.0
    %818 = vmatpush2.msra.mxu0 0.0
    %819 = vmatprep.subr.mxu0 0.0
    %820 = vmatpush2.msra.mxu0 0.0
    %821 = vmatprep.subr.mxu0 0.0
    %822 = vmatpush2.msra.mxu0 0.0
    %823 = vmatprep.mubr.f32.mxu0 0.0
    %824 = vmatmul.mubr.f32.gmra.mxu0 %v460
    %v825 = vpop.f32.mrf.mxu0
    %v826 = vadd.f32 0.0, %v825
    %v827 = vpop.f32.mrf.mxu0
    %v828 = vadd.f32 0.0, %v827
    %829 = vdwg.mxu0
    %v830 = vadd.f32 %v120, %v826
    %v831 = vadd.f32 %v124, %v828
    %832 = vmatprep.subr.mxu0 0.0
    %833 = vmatpush1.msra.mxu0 0.0
    %834 = vmatprep.subr.mxu0 0.0
    %835 = vmatpush1.msra.mxu0 0.0
    %836 = vmatprep.subr.mxu0 0.0
    %837 = vmatpush1.msra.mxu0 0.0
    %838 = vmatprep.subr.mxu0 0.0
    %839 = vmatpush1.msra.mxu0 0.0
    %840 = vmatprep.subr.mxu0 0.0
    %841 = vmatpush1.msra.mxu0 0.0
    %842 = vmatprep.subr.mxu0 0.0
    %843 = vmatpush1.msra.mxu0 0.0
    %844 = vmatprep.subr.mxu0 0.0
    %845 = vmatpush1.msra.mxu0 0.0
    %846 = vmatprep.subr.mxu0 0.0
    %847 = vmatpush1.msra.mxu0 0.0
    %848 = vmatprep.subr.mxu0 0.0
    %849 = vmatpush1.msra.mxu0 0.0
    %850 = vmatprep.subr.mxu0 0.0
    %851 = vmatpush1.msra.mxu0 0.0
    %852 = vmatprep.subr.mxu0 %v143
    %853 = vmatpush1.msra.mxu0 %v142
    %854 = vmatprep.subr.mxu0 %v141
    %855 = vmatpush1.msra.mxu0 %v140
    %856 = vmatprep.subr.mxu0 %v139
    %857 = vmatpush1.msra.mxu0 %v138
    %858 = vmatprep.subr.mxu0 %v137
    %859 = vmatpush1.msra.mxu0 %v136
    %860 = vmatprep.subr.mxu0 %v135
    %861 = vmatpush1.msra.mxu0 %v134
    %862 = vmatprep.subr.mxu0 %v133
    %863 = vmatpush1.msra.mxu0 %v132
    %864 = vmatprep.subr.mxu0 0.0
    %865 = vmatpush2.msra.mxu0 0.0
    %866 = vmatprep.subr.mxu0 0.0
    %867 = vmatpush2.msra.mxu0 0.0
    %868 = vmatprep.subr.mxu0 0.0
    %869 = vmatpush2.msra.mxu0 0.0
    %870 = vmatprep.subr.mxu0 0.0
    %871 = vmatpush2.msra.mxu0 0.0
    %872 = vmatprep.subr.mxu0 0.0
    %873 = vmatpush2.msra.mxu0 0.0
    %874 = vmatprep.subr.mxu0 0.0
    %875 = vmatpush2.msra.mxu0 0.0
    %876 = vmatprep.subr.mxu0 0.0
    %877 = vmatpush2.msra.mxu0 0.0
    %878 = vmatprep.subr.mxu0 0.0
    %879 = vmatpush2.msra.mxu0 0.0
    %880 = vmatprep.subr.mxu0 0.0
    %881 = vmatpush2.msra.mxu0 0.0
    %882 = vmatprep.subr.mxu0 0.0
    %883 = vmatpush2.msra.mxu0 0.0
    %884 = vmatprep.subr.mxu0 0.0
    %885 = vmatpush2.msra.mxu0 0.0
    %886 = vmatprep.subr.mxu0 0.0
    %887 = vmatpush2.msra.mxu0 0.0
    %888 = vmatprep.subr.mxu0 0.0
    %889 = vmatpush2.msra.mxu0 0.0
    %890 = vmatprep.subr.mxu0 0.0
    %891 = vmatpush2.msra.mxu0 0.0
    %892 = vmatprep.subr.mxu0 0.0
    %893 = vmatpush2.msra.mxu0 0.0
    %894 = vmatprep.subr.mxu0 0.0
    %895 = vmatpush2.msra.mxu0 0.0
    %896 = vmatprep.mubr.f32.mxu0 0.0
    %897 = vmatmul.mubr.f32.gmra.mxu0 %v684
    %v898 = vpop.f32.mrf.mxu0
    %v899 = vadd.f32 0.0, %v898
    %v900 = vpop.f32.mrf.mxu0
    %v901 = vadd.f32 0.0, %v900
    %902 = vdwg.mxu0
    %v903 = vadd.f32 %v830, %v899
    %v904 = vadd.f32 %v831, %v901
    %s905 = scalar_lea.vmem %s0, 40
    %v906 = vld [vmem:[%s905] sm:$0xff]
    %v908 = vsel %vm41, %v906, 0
    %910 = vmatprep.subr.mxu0 0.0
    %911 = vmatpush1.msra.mxu0 0.0
    %912 = vmatprep.subr.mxu0 0.0
    %913 = vmatpush1.msra.mxu0 0.0
    %914 = vmatprep.subr.mxu0 0.0
    %915 = vmatpush1.msra.mxu0 0.0
    %916 = vmatprep.subr.mxu0 0.0
    %917 = vmatpush1.msra.mxu0 0.0
    %918 = vmatprep.subr.mxu0 0.0
    %919 = vmatpush1.msra.mxu0 0.0
    %920 = vmatprep.subr.mxu0 0.0
    %921 = vmatpush1.msra.mxu0 0.0
    %922 = vmatprep.subr.mxu0 0.0
    %923 = vmatpush1.msra.mxu0 0.0
    %924 = vmatprep.subr.mxu0 0.0
    %925 = vmatpush1.msra.mxu0 0.0
    %926 = vmatprep.subr.mxu0 0.0
    %927 = vmatpush1.msra.mxu0 0.0
    %928 = vmatprep.subr.mxu0 0.0
    %929 = vmatpush1.msra.mxu0 0.0
    %930 = vmatprep.subr.mxu0 %v234
    %931 = vmatpush1.msra.mxu0 %v233
    %932 = vmatprep.subr.mxu0 %v232
    %933 = vmatpush1.msra.mxu0 %v231
    %934 = vmatprep.subr.mxu0 %v230
    %935 = vmatpush1.msra.mxu0 %v229
    %936 = vmatprep.subr.mxu0 %v228
    %937 = vmatpush1.msra.mxu0 %v227
    %938 = vmatprep.subr.mxu0 %v226
    %939 = vmatpush1.msra.mxu0 %v225
    %940 = vmatprep.subr.mxu0 %v224
    %941 = vmatpush1.msra.mxu0 %v223
    %942 = vmatprep.subr.mxu0 0.0
    %943 = vmatpush2.msra.mxu0 0.0
    %944 = vmatprep.subr.mxu0 0.0
    %945 = vmatpush2.msra.mxu0 0.0
    %946 = vmatprep.subr.mxu0 0.0
    %947 = vmatpush2.msra.mxu0 0.0
    %948 = vmatprep.subr.mxu0 0.0
    %949 = vmatpush2.msra.mxu0 0.0
    %950 = vmatprep.subr.mxu0 0.0
    %951 = vmatpush2.msra.mxu0 0.0
    %952 = vmatprep.subr.mxu0 0.0
    %953 = vmatpush2.msra.mxu0 0.0
    %954 = vmatprep.subr.mxu0 0.0
    %955 = vmatpush2.msra.mxu0 0.0
    %956 = vmatprep.subr.mxu0 0.0
    %957 = vmatpush2.msra.mxu0 0.0
    %958 = vmatprep.subr.mxu0 0.0
    %959 = vmatpush2.msra.mxu0 0.0
    %960 = vmatprep.subr.mxu0 0.0
    %961 = vmatpush2.msra.mxu0 0.0
    %962 = vmatprep.subr.mxu0 0.0
    %963 = vmatpush2.msra.mxu0 0.0
    %964 = vmatprep.subr.mxu0 0.0
    %965 = vmatpush2.msra.mxu0 0.0
    %966 = vmatprep.subr.mxu0 0.0
    %967 = vmatpush2.msra.mxu0 0.0
    %968 = vmatprep.subr.mxu0 0.0
    %969 = vmatpush2.msra.mxu0 0.0
    %970 = vmatprep.subr.mxu0 0.0
    %971 = vmatpush2.msra.mxu0 0.0
    %972 = vmatprep.subr.mxu0 0.0
    %973 = vmatpush2.msra.mxu0 0.0
    %974 = vmatprep.mubr.f32.mxu0 0.0
    %975 = vmatmul.mubr.f32.gmra.mxu0 %v908
    %v976 = vpop.f32.mrf.mxu0
    %v977 = vadd.f32 0.0, %v976
    %v978 = vpop.f32.mrf.mxu0
    %v979 = vadd.f32 0.0, %v978
    %980 = vdwg.mxu0
    %v981 = vadd.f32 %v903, %v977
    %v982 = vadd.f32 %v904, %v979
    %v983 = vmax.f32 %v309, %v533
    %v984 = vmax.f32 %v310, %v534
    %v985 = vmax.f32 %v757, %v981
    %v986 = vmax.f32 %v758, %v982
    %v987 = vmax.f32 %v983, %v984
    %v988 = vmax.f32 %v987, 0.0
    %v989 = vmax.f32 %v985, %v986
    %v990 = vmax.f32 %v989, 0.0
    %v991 = vlaneseq
    %v992 = vshrl.u32 %v991, 7
    %v993 = vlaneseq
    %v994 = vand.u32 %v993, 127
    %v995 = vsub.s32 %v992, %v994
    %vm996 = vcmp.eq.s32.totalorder %v995, 2
    %v997 = vsel %vm996, 1, 0
    %v998 = vcvt.s32.f32 %v997
    %v999 = vsub.s32 %v994, %v992
    %vm1000 = vcmp.eq.s32.totalorder %v999, 2
    %v1001 = vsel %vm1000, 1, 0
    %v1002 = vcvt.s32.f32 %v1001
    %vm1003 = vcmask 64512
    %v1005 = vsel %vm1003, %v998, 0
    %1007 = vmatprep.subr.mxu0 0.0
    %1008 = vmatpush1.msra.mxu0 0.0
    %1009 = vmatprep.subr.mxu0 0.0
    %1010 = vmatpush1.msra.mxu0 0.0
    %1011 = vmatprep.subr.mxu0 0.0
    %1012 = vmatpush1.msra.mxu0 0.0
    %1013 = vmatprep.subr.mxu0 0.0
    %1014 = vmatpush1.msra.mxu0 0.0
    %1015 = vmatprep.subr.mxu0 0.0
    %1016 = vmatpush1.msra.mxu0 0.0
    %1017 = vmatprep.subr.mxu0 0.0
    %1018 = vmatpush1.msra.mxu0 0.0
    %1019 = vmatprep.subr.mxu0 0.0
    %1020 = vmatpush1.msra.mxu0 0.0
    %1021 = vmatprep.subr.mxu0 0.0
    %1022 = vmatpush1.msra.mxu0 0.0
    %1023 = vmatprep.subr.mxu0 0.0
    %1024 = vmatpush1.msra.mxu0 0.0
    %1025 = vmatprep.subr.mxu0 0.0
    %1026 = vmatpush1.msra.mxu0 0.0
    %1027 = vmatprep.subr.mxu0 0.0
    %1028 = vmatpush1.msra.mxu0 0.0
    %1029 = vmatprep.subr.mxu0 0.0
    %1030 = vmatpush1.msra.mxu0 0.0
    %1031 = vmatprep.subr.mxu0 0.0
    %1032 = vmatpush1.msra.mxu0 0.0
    %1033 = vmatprep.subr.mxu0 0.0
    %1034 = vmatpush1.msra.mxu0 0.0
    %1035 = vmatprep.subr.mxu0 0.0
    %1036 = vmatpush1.msra.mxu0 0.0
    %1037 = vmatprep.subr.mxu0 0.0
    %1038 = vmatpush1.msra.mxu0 %v990
    %1039 = vmatprep.subr.mxu0 0.0
    %1040 = vmatpush2.msra.mxu0 0.0
    %1041 = vmatprep.subr.mxu0 0.0
    %1042 = vmatpush2.msra.mxu0 0.0
    %1043 = vmatprep.subr.mxu0 0.0
    %1044 = vmatpush2.msra.mxu0 0.0
    %1045 = vmatprep.subr.mxu0 0.0
    %1046 = vmatpush2.msra.mxu0 0.0
    %1047 = vmatprep.subr.mxu0 0.0
    %1048 = vmatpush2.msra.mxu0 0.0
    %1049 = vmatprep.subr.mxu0 0.0
    %1050 = vmatpush2.msra.mxu0 0.0
    %1051 = vmatprep.subr.mxu0 0.0
    %1052 = vmatpush2.msra.mxu0 0.0
    %1053 = vmatprep.subr.mxu0 0.0
    %1054 = vmatpush2.msra.mxu0 0.0
    %1055 = vmatprep.subr.mxu0 0.0
    %1056 = vmatpush2.msra.mxu0 0.0
    %1057 = vmatprep.subr.mxu0 0.0
    %1058 = vmatpush2.msra.mxu0 0.0
    %1059 = vmatprep.subr.mxu0 0.0
    %1060 = vmatpush2.msra.mxu0 0.0
    %1061 = vmatprep.subr.mxu0 0.0
    %1062 = vmatpush2.msra.mxu0 0.0
    %1063 = vmatprep.subr.mxu0 0.0
    %1064 = vmatpush2.msra.mxu0 0.0
    %1065 = vmatprep.subr.mxu0 0.0
    %1066 = vmatpush2.msra.mxu0 0.0
    %1067 = vmatprep.subr.mxu0 0.0
    %1068 = vmatpush2.msra.mxu0 0.0
    %1069 = vmatprep.subr.mxu0 0.0
    %1070 = vmatpush2.msra.mxu0 0.0
    %1071 = vmatprep.mubr.f32.mxu0 0.0
    %1072 = vmatmul.mubr.f32.gmra.mxu0 %v1005
    %v1073 = vpop.f32.mrf.mxu0
    %v1074 = vadd.f32 0.0, %v1073
    %v1075 = vpop.f32.mrf.mxu0
    %1076 = vdwg.mxu0
    %v1078 = vsel %vm1003, %v1002, 0
    %1080 = vmatprep.subr.mxu0 0.0
    %1081 = vmatpush1.msra.mxu0 0.0
    %1082 = vmatprep.subr.mxu0 0.0
    %1083 = vmatpush1.msra.mxu0 0.0
    %1084 = vmatprep.subr.mxu0 0.0
    %1085 = vmatpush1.msra.mxu0 0.0
    %1086 = vmatprep.subr.mxu0 0.0
    %1087 = vmatpush1.msra.mxu0 0.0
    %1088 = vmatprep.subr.mxu0 0.0
    %1089 = vmatpush1.msra.mxu0 0.0
    %1090 = vmatprep.subr.mxu0 0.0
    %1091 = vmatpush1.msra.mxu0 0.0
    %1092 = vmatprep.subr.mxu0 0.0
    %1093 = vmatpush1.msra.mxu0 0.0
    %1094 = vmatprep.subr.mxu0 0.0
    %1095 = vmatpush1.msra.mxu0 0.0
    %1096 = vmatprep.subr.mxu0 0.0
    %1097 = vmatpush1.msra.mxu0 0.0
    %1098 = vmatprep.subr.mxu0 0.0
    %1099 = vmatpush1.msra.mxu0 0.0
    %1100 = vmatprep.subr.mxu0 0.0
    %1101 = vmatpush1.msra.mxu0 0.0
    %1102 = vmatprep.subr.mxu0 0.0
    %1103 = vmatpush1.msra.mxu0 0.0
    %1104 = vmatprep.subr.mxu0 0.0
    %1105 = vmatpush1.msra.mxu0 0.0
    %1106 = vmatprep.subr.mxu0 0.0
    %1107 = vmatpush1.msra.mxu0 0.0
    %1108 = vmatprep.subr.mxu0 0.0
    %1109 = vmatpush1.msra.mxu0 0.0
    %1110 = vmatprep.subr.mxu0 0.0
    %1111 = vmatpush1.msra.mxu0 %v988
    %1112 = vmatprep.subr.mxu0 0.0
    %1113 = vmatpush2.msra.mxu0 0.0
    %1114 = vmatprep.subr.mxu0 0.0
    %1115 = vmatpush2.msra.mxu0 0.0
    %1116 = vmatprep.subr.mxu0 0.0
    %1117 = vmatpush2.msra.mxu0 0.0
    %1118 = vmatprep.subr.mxu0 0.0
    %1119 = vmatpush2.msra.mxu0 0.0
    %1120 = vmatprep.subr.mxu0 0.0
    %1121 = vmatpush2.msra.mxu0 0.0
    %1122 = vmatprep.subr.mxu0 0.0
    %1123 = vmatpush2.msra.mxu0 0.0
    %1124 = vmatprep.subr.mxu0 0.0
    %1125 = vmatpush2.msra.mxu0 0.0
    %1126 = vmatprep.subr.mxu0 0.0
    %1127 = vmatpush2.msra.mxu0 0.0
    %1128 = vmatprep.subr.mxu0 0.0
    %1129 = vmatpush2.msra.mxu0 0.0
    %1130 = vmatprep.subr.mxu0 0.0
    %1131 = vmatpush2.msra.mxu0 0.0
    %1132 = vmatprep.subr.mxu0 0.0
    %1133 = vmatpush2.msra.mxu0 0.0
    %1134 = vmatprep.subr.mxu0 0.0
    %1135 = vmatpush2.msra.mxu0 0.0
    %1136 = vmatprep.subr.mxu0 0.0
    %1137 = vmatpush2.msra.mxu0 0.0
    %1138 = vmatprep.subr.mxu0 0.0
    %1139 = vmatpush2.msra.mxu0 0.0
    %1140 = vmatprep.subr.mxu0 0.0
    %1141 = vmatpush2.msra.mxu0 0.0
    %1142 = vmatprep.subr.mxu0 0.0
    %1143 = vmatpush2.msra.mxu0 0.0
    %1144 = vmatprep.mubr.f32.mxu0 0.0
    %1145 = vmatmul.mubr.f32.gmra.mxu0 %v1078
    %v1146 = vpop.f32.mrf.mxu0
    %v1147 = vadd.f32 0.0, %v1146
    %v1148 = vpop.f32.mrf.mxu0
    %1149 = vdwg.mxu0
    %v1150 = vld [vmem:[%s4] sm:$0x3]
    %v1151 = vld [vmem:[%s3] sm:$0xff]
    %v1152 = vld [vmem:[%s3 + $0x8] sm:$0xff]
    %v1153 = vld [vmem:[%s3 + $0x10] sm:$0xff]
    %v1154 = vld [vmem:[%s3 + $0x18] sm:$0xff]
    %v1155 = vld [vmem:[%s3 + $0x20] sm:$0xff]
    %v1156 = vld [vmem:[%s3 + $0x28] sm:$0xff]
    %v1157 = vld [vmem:[%s3 + $0x30] sm:$0xff]
    %v1158 = vld [vmem:[%s3 + $0x38] sm:$0xff]
    %v1159 = vld [vmem:[%s3 + $0x40] sm:$0xff]
    %v1160 = vld [vmem:[%s3 + $0x48] sm:$0xff]
    %v1161 = vld [vmem:[%s3 + $0x50] sm:$0xff]
    %v1162 = vld [vmem:[%s3 + $0x58] sm:$0xff]
    %v1163 = vld [vmem:[%s3 + $0x60] sm:$0xff]
    %v1164 = vld [vmem:[%s3 + $0x68] sm:$0xff]
    %v1165 = vld [vmem:[%s3 + $0x70] sm:$0xff]
    %v1166 = vld [vmem:[%s3 + $0x78] sm:$0xff]
    %v1167 = vld [vmem:[%s3 + $0x80] sm:$0xff]
    %v1168 = vld [vmem:[%s3 + $0x88] sm:$0xff]
    %v1169 = vld [vmem:[%s3 + $0x90] sm:$0xff]
    %v1170 = vld [vmem:[%s3 + $0x98] sm:$0xff]
    %v1171 = vld [vmem:[%s3 + $0xa0] sm:$0xff]
    %v1172 = vld [vmem:[%s3 + $0xa8] sm:$0xff]
    %v1173 = vld [vmem:[%s3 + $0xb0] sm:$0xff]
    %v1174 = vld [vmem:[%s3 + $0xb8] sm:$0xff]
    %v1175 = vld [vmem:[%s3 + $0xc0] sm:$0xff]
    %v1176 = vld [vmem:[%s3 + $0xc8] sm:$0xff]
    %v1177 = vld [vmem:[%s3 + $0xd0] sm:$0xff]
    %v1178 = vld [vmem:[%s3 + $0xd8] sm:$0xff]
    %v1179 = vld [vmem:[%s3 + $0xe0] sm:$0xff]
    %v1180 = vld [vmem:[%s3 + $0xe8] sm:$0xff]
    %v1181 = vld [vmem:[%s3 + $0xf0] sm:$0xff]
    %v1182 = vld [vmem:[%s3 + $0xf8] sm:$0xff]
    %1183 = vmatprep.subr.mxu0 %v1182
    %1184 = vmatpush1.msra.mxu0 %v1181
    %1185 = vmatprep.subr.mxu0 %v1180
    %1186 = vmatpush1.msra.mxu0 %v1179
    %1187 = vmatprep.subr.mxu0 %v1178
    %1188 = vmatpush1.msra.mxu0 %v1177
    %1189 = vmatprep.subr.mxu0 %v1176
    %1190 = vmatpush1.msra.mxu0 %v1175
    %1191 = vmatprep.subr.mxu0 %v1174
    %1192 = vmatpush1.msra.mxu0 %v1173
    %1193 = vmatprep.subr.mxu0 %v1172
    %1194 = vmatpush1.msra.mxu0 %v1171
    %1195 = vmatprep.subr.mxu0 %v1170
    %1196 = vmatpush1.msra.mxu0 %v1169
    %1197 = vmatprep.subr.mxu0 %v1168
    %1198 = vmatpush1.msra.mxu0 %v1167
    %1199 = vmatprep.subr.mxu0 %v1166
    %1200 = vmatpush1.msra.mxu0 %v1165
    %1201 = vmatprep.subr.mxu0 %v1164
    %1202 = vmatpush1.msra.mxu0 %v1163
    %1203 = vmatprep.subr.mxu0 %v1162
    %1204 = vmatpush1.msra.mxu0 %v1161
    %1205 = vmatprep.subr.mxu0 %v1160
    %1206 = vmatpush1.msra.mxu0 %v1159
    %1207 = vmatprep.subr.mxu0 %v1158
    %1208 = vmatpush1.msra.mxu0 %v1157
    %1209 = vmatprep.subr.mxu0 %v1156
    %1210 = vmatpush1.msra.mxu0 %v1155
    %1211 = vmatprep.subr.mxu0 %v1154
    %1212 = vmatpush1.msra.mxu0 %v1153
    %1213 = vmatprep.subr.mxu0 %v1152
    %1214 = vmatpush1.msra.mxu0 %v1151
    %1215 = vmatprep.subr.mxu0 0.0
    %1216 = vmatpush2.msra.mxu0 0.0
    %1217 = vmatprep.subr.mxu0 0.0
    %1218 = vmatpush2.msra.mxu0 0.0
    %1219 = vmatprep.subr.mxu0 0.0
    %1220 = vmatpush2.msra.mxu0 0.0
    %1221 = vmatprep.subr.mxu0 0.0
    %1222 = vmatpush2.msra.mxu0 0.0
    %1223 = vmatprep.subr.mxu0 0.0
    %1224 = vmatpush2.msra.mxu0 0.0
    %1225 = vmatprep.subr.mxu0 0.0
    %1226 = vmatpush2.msra.mxu0 0.0
    %1227 = vmatprep.subr.mxu0 0.0
    %1228 = vmatpush2.msra.mxu0 0.0
    %1229 = vmatprep.subr.mxu0 0.0
    %1230 = vmatpush2.msra.mxu0 0.0
    %1231 = vmatprep.subr.mxu0 0.0
    %1232 = vmatpush2.msra.mxu0 0.0
    %1233 = vmatprep.subr.mxu0 0.0
    %1234 = vmatpush2.msra.mxu0 0.0
    %1235 = vmatprep.subr.mxu0 0.0
    %1236 = vmatpush2.msra.mxu0 0.0
    %1237 = vmatprep.subr.mxu0 0.0
    %1238 = vmatpush2.msra.mxu0 0.0
    %1239 = vmatprep.subr.mxu0 0.0
    %1240 = vmatpush2.msra.mxu0 0.0
    %1241 = vmatprep.subr.mxu0 0.0
    %1242 = vmatpush2.msra.mxu0 0.0
    %1243 = vmatprep.subr.mxu0 0.0
    %1244 = vmatpush2.msra.mxu0 0.0
    %1245 = vmatprep.subr.mxu0 0.0
    %1246 = vmatpush2.msra.mxu0 0.0
    %1247 = vmatprep.mubr.f32.mxu0 0.0
    %1248 = vmatmul.mubr.f32.gmra.mxu0 %v1074
    %v1249 = vpop.f32.mrf.mxu0
    %v1250 = vadd.f32 0.0, %v1249
    %v1251 = vpop.f32.mrf.mxu0
    %v1252 = vadd.f32 0.0, %v1251
    %1253 = vdwg.mxu0
    %v1255 = vlaneseq
    %v1256 = vshrl.u32 %v1255, 7
    %v1257 = vsub.s32 0, %v1256
    %v1258 = vrot.slane %v1150, %v1257
    %v1259 = vlaneseq
    %v1260 = vshrl.u32 %v1259, 7
    %v1261 = vsub.s32 1, %v1260
    %v1262 = vrot.slane %v1150, %v1261
    %v1265 = vadd.f32 %v1258, %v1250
    %v1266 = vadd.f32 %v1262, %v1252
    %s1267 = scalar_lea.vmem %s3, 256
    %v1268 = vld [vmem:[%s1267] sm:$0xff]
    %v1269 = vld [vmem:[%s1267 + $0x8] sm:$0xff]
    %v1270 = vld [vmem:[%s1267 + $0x10] sm:$0xff]
    %v1271 = vld [vmem:[%s1267 + $0x18] sm:$0xff]
    %v1272 = vld [vmem:[%s1267 + $0x20] sm:$0xff]
    %v1273 = vld [vmem:[%s1267 + $0x28] sm:$0xff]
    %v1274 = vld [vmem:[%s1267 + $0x30] sm:$0xff]
    %v1275 = vld [vmem:[%s1267 + $0x38] sm:$0xff]
    %v1276 = vld [vmem:[%s1267 + $0x40] sm:$0xff]
    %v1277 = vld [vmem:[%s1267 + $0x48] sm:$0xff]
    %v1278 = vld [vmem:[%s1267 + $0x50] sm:$0xff]
    %v1279 = vld [vmem:[%s1267 + $0x58] sm:$0xff]
    %v1280 = vld [vmem:[%s1267 + $0x60] sm:$0xff]
    %v1281 = vld [vmem:[%s1267 + $0x68] sm:$0xff]
    %v1282 = vld [vmem:[%s1267 + $0x70] sm:$0xff]
    %v1283 = vld [vmem:[%s1267 + $0x78] sm:$0xff]
    %v1284 = vld [vmem:[%s1267 + $0x80] sm:$0xff]
    %v1285 = vld [vmem:[%s1267 + $0x88] sm:$0xff]
    %v1286 = vld [vmem:[%s1267 + $0x90] sm:$0xff]
    %v1287 = vld [vmem:[%s1267 + $0x98] sm:$0xff]
    %v1288 = vld [vmem:[%s1267 + $0xa0] sm:$0xff]
    %v1289 = vld [vmem:[%s1267 + $0xa8] sm:$0xff]
    %v1290 = vld [vmem:[%s1267 + $0xb0] sm:$0xff]
    %v1291 = vld [vmem:[%s1267 + $0xb8] sm:$0xff]
    %v1292 = vld [vmem:[%s1267 + $0xc0] sm:$0xff]
    %v1293 = vld [vmem:[%s1267 + $0xc8] sm:$0xff]
    %v1294 = vld [vmem:[%s1267 + $0xd0] sm:$0xff]
    %v1295 = vld [vmem:[%s1267 + $0xd8] sm:$0xff]
    %v1296 = vld [vmem:[%s1267 + $0xe0] sm:$0xff]
    %v1297 = vld [vmem:[%s1267 + $0xe8] sm:$0xff]
    %v1298 = vld [vmem:[%s1267 + $0xf0] sm:$0xff]
    %v1299 = vld [vmem:[%s1267 + $0xf8] sm:$0xff]
    %1300 = vmatprep.subr.mxu0 %v1299
    %1301 = vmatpush1.msra.mxu0 %v1298
    %1302 = vmatprep.subr.mxu0 %v1297
    %1303 = vmatpush1.msra.mxu0 %v1296
    %1304 = vmatprep.subr.mxu0 %v1295
    %1305 = vmatpush1.msra.mxu0 %v1294
    %1306 = vmatprep.subr.mxu0 %v1293
    %1307 = vmatpush1.msra.mxu0 %v1292
    %1308 = vmatprep.subr.mxu0 %v1291
    %1309 = vmatpush1.msra.mxu0 %v1290
    %1310 = vmatprep.subr.mxu0 %v1289
    %1311 = vmatpush1.msra.mxu0 %v1288
    %1312 = vmatprep.subr.mxu0 %v1287
    %1313 = vmatpush1.msra.mxu0 %v1286
    %1314 = vmatprep.subr.mxu0 %v1285
    %1315 = vmatpush1.msra.mxu0 %v1284
    %1316 = vmatprep.subr.mxu0 %v1283
    %1317 = vmatpush1.msra.mxu0 %v1282
    %1318 = vmatprep.subr.mxu0 %v1281
    %1319 = vmatpush1.msra.mxu0 %v1280
    %1320 = vmatprep.subr.mxu0 %v1279
    %1321 = vmatpush1.msra.mxu0 %v1278
    %1322 = vmatprep.subr.mxu0 %v1277
    %1323 = vmatpush1.msra.mxu0 %v1276
    %1324 = vmatprep.subr.mxu0 %v1275
    %1325 = vmatpush1.msra.mxu0 %v1274
    %1326 = vmatprep.subr.mxu0 %v1273
    %1327 = vmatpush1.msra.mxu0 %v1272
    %1328 = vmatprep.subr.mxu0 %v1271
    %1329 = vmatpush1.msra.mxu0 %v1270
    %1330 = vmatprep.subr.mxu0 %v1269
    %1331 = vmatpush1.msra.mxu0 %v1268
    %1332 = vmatprep.subr.mxu0 0.0
    %1333 = vmatpush2.msra.mxu0 0.0
    %1334 = vmatprep.subr.mxu0 0.0
    %1335 = vmatpush2.msra.mxu0 0.0
    %1336 = vmatprep.subr.mxu0 0.0
    %1337 = vmatpush2.msra.mxu0 0.0
    %1338 = vmatprep.subr.mxu0 0.0
    %1339 = vmatpush2.msra.mxu0 0.0
    %1340 = vmatprep.subr.mxu0 0.0
    %1341 = vmatpush2.msra.mxu0 0.0
    %1342 = vmatprep.subr.mxu0 0.0
    %1343 = vmatpush2.msra.mxu0 0.0
    %1344 = vmatprep.subr.mxu0 0.0
    %1345 = vmatpush2.msra.mxu0 0.0
    %1346 = vmatprep.subr.mxu0 0.0
    %1347 = vmatpush2.msra.mxu0 0.0
    %1348 = vmatprep.subr.mxu0 0.0
    %1349 = vmatpush2.msra.mxu0 0.0
    %1350 = vmatprep.subr.mxu0 0.0
    %1351 = vmatpush2.msra.mxu0 0.0
    %1352 = vmatprep.subr.mxu0 0.0
    %1353 = vmatpush2.msra.mxu0 0.0
    %1354 = vmatprep.subr.mxu0 0.0
    %1355 = vmatpush2.msra.mxu0 0.0
    %1356 = vmatprep.subr.mxu0 0.0
    %1357 = vmatpush2.msra.mxu0 0.0
    %1358 = vmatprep.subr.mxu0 0.0
    %1359 = vmatpush2.msra.mxu0 0.0
    %1360 = vmatprep.subr.mxu0 0.0
    %1361 = vmatpush2.msra.mxu0 0.0
    %1362 = vmatprep.subr.mxu0 0.0
    %1363 = vmatpush2.msra.mxu0 0.0
    %1364 = vmatprep.mubr.f32.mxu0 0.0
    %1365 = vmatmul.mubr.f32.gmra.mxu0 %v988
    %v1366 = vpop.f32.mrf.mxu0
    %v1367 = vadd.f32 0.0, %v1366
    %v1368 = vpop.f32.mrf.mxu0
    %v1369 = vadd.f32 0.0, %v1368
    %1370 = vdwg.mxu0
    %v1371 = vadd.f32 %v1265, %v1367
    %v1372 = vadd.f32 %v1266, %v1369
    %s1373 = scalar_lea.vmem %s3, 512
    %v1374 = vld [vmem:[%s1373] sm:$0xff]
    %v1375 = vld [vmem:[%s1373 + $0x8] sm:$0xff]
    %v1376 = vld [vmem:[%s1373 + $0x10] sm:$0xff]
    %v1377 = vld [vmem:[%s1373 + $0x18] sm:$0xff]
    %v1378 = vld [vmem:[%s1373 + $0x20] sm:$0xff]
    %v1379 = vld [vmem:[%s1373 + $0x28] sm:$0xff]
    %v1380 = vld [vmem:[%s1373 + $0x30] sm:$0xff]
    %v1381 = vld [vmem:[%s1373 + $0x38] sm:$0xff]
    %v1382 = vld [vmem:[%s1373 + $0x40] sm:$0xff]
    %v1383 = vld [vmem:[%s1373 + $0x48] sm:$0xff]
    %v1384 = vld [vmem:[%s1373 + $0x50] sm:$0xff]
    %v1385 = vld [vmem:[%s1373 + $0x58] sm:$0xff]
    %v1386 = vld [vmem:[%s1373 + $0x60] sm:$0xff]
    %v1387 = vld [vmem:[%s1373 + $0x68] sm:$0xff]
    %v1388 = vld [vmem:[%s1373 + $0x70] sm:$0xff]
    %v1389 = vld [vmem:[%s1373 + $0x78] sm:$0xff]
    %v1390 = vld [vmem:[%s1373 + $0x80] sm:$0xff]
    %v1391 = vld [vmem:[%s1373 + $0x88] sm:$0xff]
    %v1392 = vld [vmem:[%s1373 + $0x90] sm:$0xff]
    %v1393 = vld [vmem:[%s1373 + $0x98] sm:$0xff]
    %v1394 = vld [vmem:[%s1373 + $0xa0] sm:$0xff]
    %v1395 = vld [vmem:[%s1373 + $0xa8] sm:$0xff]
    %v1396 = vld [vmem:[%s1373 + $0xb0] sm:$0xff]
    %v1397 = vld [vmem:[%s1373 + $0xb8] sm:$0xff]
    %v1398 = vld [vmem:[%s1373 + $0xc0] sm:$0xff]
    %v1399 = vld [vmem:[%s1373 + $0xc8] sm:$0xff]
    %v1400 = vld [vmem:[%s1373 + $0xd0] sm:$0xff]
    %v1401 = vld [vmem:[%s1373 + $0xd8] sm:$0xff]
    %v1402 = vld [vmem:[%s1373 + $0xe0] sm:$0xff]
    %v1403 = vld [vmem:[%s1373 + $0xe8] sm:$0xff]
    %v1404 = vld [vmem:[%s1373 + $0xf0] sm:$0xff]
    %v1405 = vld [vmem:[%s1373 + $0xf8] sm:$0xff]
    %1406 = vmatprep.subr.mxu0 %v1405
    %1407 = vmatpush1.msra.mxu0 %v1404
    %1408 = vmatprep.subr.mxu0 %v1403
    %1409 = vmatpush1.msra.mxu0 %v1402
    %1410 = vmatprep.subr.mxu0 %v1401
    %1411 = vmatpush1.msra.mxu0 %v1400
    %1412 = vmatprep.subr.mxu0 %v1399
    %1413 = vmatpush1.msra.mxu0 %v1398
    %1414 = vmatprep.subr.mxu0 %v1397
    %1415 = vmatpush1.msra.mxu0 %v1396
    %1416 = vmatprep.subr.mxu0 %v1395
    %1417 = vmatpush1.msra.mxu0 %v1394
    %1418 = vmatprep.subr.mxu0 %v1393
    %1419 = vmatpush1.msra.mxu0 %v1392
    %1420 = vmatprep.subr.mxu0 %v1391
    %1421 = vmatpush1.msra.mxu0 %v1390
    %1422 = vmatprep.subr.mxu0 %v1389
    %1423 = vmatpush1.msra.mxu0 %v1388
    %1424 = vmatprep.subr.mxu0 %v1387
    %1425 = vmatpush1.msra.mxu0 %v1386
    %1426 = vmatprep.subr.mxu0 %v1385
    %1427 = vmatpush1.msra.mxu0 %v1384
    %1428 = vmatprep.subr.mxu0 %v1383
    %1429 = vmatpush1.msra.mxu0 %v1382
    %1430 = vmatprep.subr.mxu0 %v1381
    %1431 = vmatpush1.msra.mxu0 %v1380
    %1432 = vmatprep.subr.mxu0 %v1379
    %1433 = vmatpush1.msra.mxu0 %v1378
    %1434 = vmatprep.subr.mxu0 %v1377
    %1435 = vmatpush1.msra.mxu0 %v1376
    %1436 = vmatprep.subr.mxu0 %v1375
    %1437 = vmatpush1.msra.mxu0 %v1374
    %1438 = vmatprep.subr.mxu0 0.0
    %1439 = vmatpush2.msra.mxu0 0.0
    %1440 = vmatprep.subr.mxu0 0.0
    %1441 = vmatpush2.msra.mxu0 0.0
    %1442 = vmatprep.subr.mxu0 0.0
    %1443 = vmatpush2.msra.mxu0 0.0
    %1444 = vmatprep.subr.mxu0 0.0
    %1445 = vmatpush2.msra.mxu0 0.0
    %1446 = vmatprep.subr.mxu0 0.0
    %1447 = vmatpush2.msra.mxu0 0.0
    %1448 = vmatprep.subr.mxu0 0.0
    %1449 = vmatpush2.msra.mxu0 0.0
    %1450 = vmatprep.subr.mxu0 0.0
    %1451 = vmatpush2.msra.mxu0 0.0
    %1452 = vmatprep.subr.mxu0 0.0
    %1453 = vmatpush2.msra.mxu0 0.0
    %1454 = vmatprep.subr.mxu0 0.0
    %1455 = vmatpush2.msra.mxu0 0.0
    %1456 = vmatprep.subr.mxu0 0.0
    %1457 = vmatpush2.msra.mxu0 0.0
    %1458 = vmatprep.subr.mxu0 0.0
    %1459 = vmatpush2.msra.mxu0 0.0
    %1460 = vmatprep.subr.mxu0 0.0
    %1461 = vmatpush2.msra.mxu0 0.0
    %1462 = vmatprep.subr.mxu0 0.0
    %1463 = vmatpush2.msra.mxu0 0.0
    %1464 = vmatprep.subr.mxu0 0.0
    %1465 = vmatpush2.msra.mxu0 0.0
    %1466 = vmatprep.subr.mxu0 0.0
    %1467 = vmatpush2.msra.mxu0 0.0
    %1468 = vmatprep.subr.mxu0 0.0
    %1469 = vmatpush2.msra.mxu0 0.0
    %1470 = vmatprep.mubr.f32.mxu0 0.0
    %1471 = vmatmul.mubr.f32.gmra.mxu0 %v990
    %v1472 = vpop.f32.mrf.mxu0
    %v1473 = vadd.f32 0.0, %v1472
    %v1474 = vpop.f32.mrf.mxu0
    %v1475 = vadd.f32 0.0, %v1474
    %1476 = vdwg.mxu0
    %v1477 = vadd.f32 %v1371, %v1473
    %v1478 = vadd.f32 %v1372, %v1475
    %1479 = vmatprep.subr.mxu0 %v1182
    %1480 = vmatpush1.msra.mxu0 %v1181
    %1481 = vmatprep.subr.mxu0 %v1180
    %1482 = vmatpush1.msra.mxu0 %v1179
    %1483 = vmatprep.subr.mxu0 %v1178
    %1484 = vmatpush1.msra.mxu0 %v1177
    %1485 = vmatprep.subr.mxu0 %v1176
    %1486 = vmatpush1.msra.mxu0 %v1175
    %1487 = vmatprep.subr.mxu0 %v1174
    %1488 = vmatpush1.msra.mxu0 %v1173
    %1489 = vmatprep.subr.mxu0 %v1172
    %1490 = vmatpush1.msra.mxu0 %v1171
    %1491 = vmatprep.subr.mxu0 %v1170
    %1492 = vmatpush1.msra.mxu0 %v1169
    %1493 = vmatprep.subr.mxu0 %v1168
    %1494 = vmatpush1.msra.mxu0 %v1167
    %1495 = vmatprep.subr.mxu0 %v1166
    %1496 = vmatpush1.msra.mxu0 %v1165
    %1497 = vmatprep.subr.mxu0 %v1164
    %1498 = vmatpush1.msra.mxu0 %v1163
    %1499 = vmatprep.subr.mxu0 %v1162
    %1500 = vmatpush1.msra.mxu0 %v1161
    %1501 = vmatprep.subr.mxu0 %v1160
    %1502 = vmatpush1.msra.mxu0 %v1159
    %1503 = vmatprep.subr.mxu0 %v1158
    %1504 = vmatpush1.msra.mxu0 %v1157
    %1505 = vmatprep.subr.mxu0 %v1156
    %1506 = vmatpush1.msra.mxu0 %v1155
    %1507 = vmatprep.subr.mxu0 %v1154
    %1508 = vmatpush1.msra.mxu0 %v1153
    %1509 = vmatprep.subr.mxu0 %v1152
    %1510 = vmatpush1.msra.mxu0 %v1151
    %1511 = vmatprep.subr.mxu0 0.0
    %1512 = vmatpush2.msra.mxu0 0.0
    %1513 = vmatprep.subr.mxu0 0.0
    %1514 = vmatpush2.msra.mxu0 0.0
    %1515 = vmatprep.subr.mxu0 0.0
    %1516 = vmatpush2.msra.mxu0 0.0
    %1517 = vmatprep.subr.mxu0 0.0
    %1518 = vmatpush2.msra.mxu0 0.0
    %1519 = vmatprep.subr.mxu0 0.0
    %1520 = vmatpush2.msra.mxu0 0.0
    %1521 = vmatprep.subr.mxu0 0.0
    %1522 = vmatpush2.msra.mxu0 0.0
    %1523 = vmatprep.subr.mxu0 0.0
    %1524 = vmatpush2.msra.mxu0 0.0
    %1525 = vmatprep.subr.mxu0 0.0
    %1526 = vmatpush2.msra.mxu0 0.0
    %1527 = vmatprep.subr.mxu0 0.0
    %1528 = vmatpush2.msra.mxu0 0.0
    %1529 = vmatprep.subr.mxu0 0.0
    %1530 = vmatpush2.msra.mxu0 0.0
    %1531 = vmatprep.subr.mxu0 0.0
    %1532 = vmatpush2.msra.mxu0 0.0
    %1533 = vmatprep.subr.mxu0 0.0
    %1534 = vmatpush2.msra.mxu0 0.0
    %1535 = vmatprep.subr.mxu0 0.0
    %1536 = vmatpush2.msra.mxu0 0.0
    %1537 = vmatprep.subr.mxu0 0.0
    %1538 = vmatpush2.msra.mxu0 0.0
    %1539 = vmatprep.subr.mxu0 0.0
    %1540 = vmatpush2.msra.mxu0 0.0
    %1541 = vmatprep.subr.mxu0 0.0
    %1542 = vmatpush2.msra.mxu0 0.0
    %1543 = vmatprep.mubr.f32.mxu0 0.0
    %1544 = vmatmul.mubr.f32.gmra.mxu0 %v988
    %v1545 = vpop.f32.mrf.mxu0
    %v1546 = vadd.f32 0.0, %v1545
    %v1547 = vpop.f32.mrf.mxu0
    %v1548 = vadd.f32 0.0, %v1547
    %1549 = vdwg.mxu0
    %v1550 = vadd.f32 %v1258, %v1546
    %v1551 = vadd.f32 %v1262, %v1548
    %1552 = vmatprep.subr.mxu0 %v1299
    %1553 = vmatpush1.msra.mxu0 %v1298
    %1554 = vmatprep.subr.mxu0 %v1297
    %1555 = vmatpush1.msra.mxu0 %v1296
    %1556 = vmatprep.subr.mxu0 %v1295
    %1557 = vmatpush1.msra.mxu0 %v1294
    %1558 = vmatprep.subr.mxu0 %v1293
    %1559 = vmatpush1.msra.mxu0 %v1292
    %1560 = vmatprep.subr.mxu0 %v1291
    %1561 = vmatpush1.msra.mxu0 %v1290
    %1562 = vmatprep.subr.mxu0 %v1289
    %1563 = vmatpush1.msra.mxu0 %v1288
    %1564 = vmatprep.subr.mxu0 %v1287
    %1565 = vmatpush1.msra.mxu0 %v1286
    %1566 = vmatprep.subr.mxu0 %v1285
    %1567 = vmatpush1.msra.mxu0 %v1284
    %1568 = vmatprep.subr.mxu0 %v1283
    %1569 = vmatpush1.msra.mxu0 %v1282
    %1570 = vmatprep.subr.mxu0 %v1281
    %1571 = vmatpush1.msra.mxu0 %v1280
    %1572 = vmatprep.subr.mxu0 %v1279
    %1573 = vmatpush1.msra.mxu0 %v1278
    %1574 = vmatprep.subr.mxu0 %v1277
    %1575 = vmatpush1.msra.mxu0 %v1276
    %1576 = vmatprep.subr.mxu0 %v1275
    %1577 = vmatpush1.msra.mxu0 %v1274
    %1578 = vmatprep.subr.mxu0 %v1273
    %1579 = vmatpush1.msra.mxu0 %v1272
    %1580 = vmatprep.subr.mxu0 %v1271
    %1581 = vmatpush1.msra.mxu0 %v1270
    %1582 = vmatprep.subr.mxu0 %v1269
    %1583 = vmatpush1.msra.mxu0 %v1268
    %1584 = vmatprep.subr.mxu0 0.0
    %1585 = vmatpush2.msra.mxu0 0.0
    %1586 = vmatprep.subr.mxu0 0.0
    %1587 = vmatpush2.msra.mxu0 0.0
    %1588 = vmatprep.subr.mxu0 0.0
    %1589 = vmatpush2.msra.mxu0 0.0
    %1590 = vmatprep.subr.mxu0 0.0
    %1591 = vmatpush2.msra.mxu0 0.0
    %1592 = vmatprep.subr.mxu0 0.0
    %1593 = vmatpush2.msra.mxu0 0.0
    %1594 = vmatprep.subr.mxu0 0.0
    %1595 = vmatpush2.msra.mxu0 0.0
    %1596 = vmatprep.subr.mxu0 0.0
    %1597 = vmatpush2.msra.mxu0 0.0
    %1598 = vmatprep.subr.mxu0 0.0
    %1599 = vmatpush2.msra.mxu0 0.0
    %1600 = vmatprep.subr.mxu0 0.0
    %1601 = vmatpush2.msra.mxu0 0.0
    %1602 = vmatprep.subr.mxu0 0.0
    %1603 = vmatpush2.msra.mxu0 0.0
    %1604 = vmatprep.subr.mxu0 0.0
    %1605 = vmatpush2.msra.mxu0 0.0
    %1606 = vmatprep.subr.mxu0 0.0
    %1607 = vmatpush2.msra.mxu0 0.0
    %1608 = vmatprep.subr.mxu0 0.0
    %1609 = vmatpush2.msra.mxu0 0.0
    %1610 = vmatprep.subr.mxu0 0.0
    %1611 = vmatpush2.msra.mxu0 0.0
    %1612 = vmatprep.subr.mxu0 0.0
    %1613 = vmatpush2.msra.mxu0 0.0
    %1614 = vmatprep.subr.mxu0 0.0
    %1615 = vmatpush2.msra.mxu0 0.0
    %1616 = vmatprep.mubr.f32.mxu0 0.0
    %1617 = vmatmul.mubr.f32.gmra.mxu0 %v990
    %v1618 = vpop.f32.mrf.mxu0
    %v1619 = vadd.f32 0.0, %v1618
    %v1620 = vpop.f32.mrf.mxu0
    %v1621 = vadd.f32 0.0, %v1620
    %1622 = vdwg.mxu0
    %v1623 = vadd.f32 %v1550, %v1619
    %v1624 = vadd.f32 %v1551, %v1621
    %1625 = vmatprep.subr.mxu0 %v1405
    %1626 = vmatpush1.msra.mxu0 %v1404
    %1627 = vmatprep.subr.mxu0 %v1403
    %1628 = vmatpush1.msra.mxu0 %v1402
    %1629 = vmatprep.subr.mxu0 %v1401
    %1630 = vmatpush1.msra.mxu0 %v1400
    %1631 = vmatprep.subr.mxu0 %v1399
    %1632 = vmatpush1.msra.mxu0 %v1398
    %1633 = vmatprep.subr.mxu0 %v1397
    %1634 = vmatpush1.msra.mxu0 %v1396
    %1635 = vmatprep.subr.mxu0 %v1395
    %1636 = vmatpush1.msra.mxu0 %v1394
    %1637 = vmatprep.subr.mxu0 %v1393
    %1638 = vmatpush1.msra.mxu0 %v1392
    %1639 = vmatprep.subr.mxu0 %v1391
    %1640 = vmatpush1.msra.mxu0 %v1390
    %1641 = vmatprep.subr.mxu0 %v1389
    %1642 = vmatpush1.msra.mxu0 %v1388
    %1643 = vmatprep.subr.mxu0 %v1387
    %1644 = vmatpush1.msra.mxu0 %v1386
    %1645 = vmatprep.subr.mxu0 %v1385
    %1646 = vmatpush1.msra.mxu0 %v1384
    %1647 = vmatprep.subr.mxu0 %v1383
    %1648 = vmatpush1.msra.mxu0 %v1382
    %1649 = vmatprep.subr.mxu0 %v1381
    %1650 = vmatpush1.msra.mxu0 %v1380
    %1651 = vmatprep.subr.mxu0 %v1379
    %1652 = vmatpush1.msra.mxu0 %v1378
    %1653 = vmatprep.subr.mxu0 %v1377
    %1654 = vmatpush1.msra.mxu0 %v1376
    %1655 = vmatprep.subr.mxu0 %v1375
    %1656 = vmatpush1.msra.mxu0 %v1374
    %1657 = vmatprep.subr.mxu0 0.0
    %1658 = vmatpush2.msra.mxu0 0.0
    %1659 = vmatprep.subr.mxu0 0.0
    %1660 = vmatpush2.msra.mxu0 0.0
    %1661 = vmatprep.subr.mxu0 0.0
    %1662 = vmatpush2.msra.mxu0 0.0
    %1663 = vmatprep.subr.mxu0 0.0
    %1664 = vmatpush2.msra.mxu0 0.0
    %1665 = vmatprep.subr.mxu0 0.0
    %1666 = vmatpush2.msra.mxu0 0.0
    %1667 = vmatprep.subr.mxu0 0.0
    %1668 = vmatpush2.msra.mxu0 0.0
    %1669 = vmatprep.subr.mxu0 0.0
    %1670 = vmatpush2.msra.mxu0 0.0
    %1671 = vmatprep.subr.mxu0 0.0
    %1672 = vmatpush2.msra.mxu0 0.0
    %1673 = vmatprep.subr.mxu0 0.0
    %1674 = vmatpush2.msra.mxu0 0.0
    %1675 = vmatprep.subr.mxu0 0.0
    %1676 = vmatpush2.msra.mxu0 0.0
    %1677 = vmatprep.subr.mxu0 0.0
    %1678 = vmatpush2.msra.mxu0 0.0
    %1679 = vmatprep.subr.mxu0 0.0
    %1680 = vmatpush2.msra.mxu0 0.0
    %1681 = vmatprep.subr.mxu0 0.0
    %1682 = vmatpush2.msra.mxu0 0.0
    %1683 = vmatprep.subr.mxu0 0.0
    %1684 = vmatpush2.msra.mxu0 0.0
    %1685 = vmatprep.subr.mxu0 0.0
    %1686 = vmatpush2.msra.mxu0 0.0
    %1687 = vmatprep.subr.mxu0 0.0
    %1688 = vmatpush2.msra.mxu0 0.0
    %1689 = vmatprep.mubr.f32.mxu0 0.0
    %1690 = vmatmul.mubr.f32.gmra.mxu0 %v1147
    %v1691 = vpop.f32.mrf.mxu0
    %v1692 = vadd.f32 0.0, %v1691
    %v1693 = vpop.f32.mrf.mxu0
    %v1694 = vadd.f32 0.0, %v1693
    %1695 = vdwg.mxu0
    %v1696 = vadd.f32 %v1623, %v1692
    %v1697 = vadd.f32 %v1624, %v1694
    %v1698 = vmax.f32 %v1477, %v1696
    %v1699 = vmax.f32 %v1478, %v1697
    %v1700 = vmax.f32 %v1698, %v1699
    %v1701 = vmax.f32 %v1700, 0.0
    %1702 = vst [vmem:[#allocation2] sm:$0xff] %v1701
    %v1703 = vld [vmem:[%s6] sm:$0x1]
    %v1704 = vld [vmem:[#allocation2] sm:$0x3]
    %v1705 = vld [vmem:[%s5] sm:$0xff]
    %v1706 = vld [vmem:[%s5 + $0x8] sm:$0xff]
    %v1707 = vld [vmem:[%s5 + $0x10] sm:$0xff]
    %v1708 = vld [vmem:[%s5 + $0x18] sm:$0xff]
    %v1709 = vld [vmem:[%s5 + $0x20] sm:$0xff]
    %v1710 = vld [vmem:[%s5 + $0x28] sm:$0xff]
    %v1711 = vld [vmem:[%s5 + $0x30] sm:$0xff]
    %v1712 = vld [vmem:[%s5 + $0x38] sm:$0xff]
    %v1713 = vld [vmem:[%s5 + $0x40] sm:$0xff]
    %v1714 = vld [vmem:[%s5 + $0x48] sm:$0xff]
    %v1715 = vld [vmem:[%s5 + $0x50] sm:$0xff]
    %v1716 = vld [vmem:[%s5 + $0x58] sm:$0xff]
    %v1717 = vld [vmem:[%s5 + $0x60] sm:$0xff]
    %v1718 = vld [vmem:[%s5 + $0x68] sm:$0xff]
    %v1719 = vld [vmem:[%s5 + $0x70] sm:$0xff]
    %v1720 = vld [vmem:[%s5 + $0x78] sm:$0xff]
    %1721 = vmatprep.subr.mxu0 0.0
    %1722 = vmatpush1.msra.mxu0 %v1720
    %1723 = vmatprep.subr.mxu0 0.0
    %1724 = vmatpush1.msra.mxu0 %v1719
    %1725 = vmatprep.subr.mxu0 0.0
    %1726 = vmatpush1.msra.mxu0 %v1718
    %1727 = vmatprep.subr.mxu0 0.0
    %1728 = vmatpush1.msra.mxu0 %v1717
    %1729 = vmatprep.subr.mxu0 0.0
    %1730 = vmatpush1.msra.mxu0 %v1716
    %1731 = vmatprep.subr.mxu0 0.0
    %1732 = vmatpush1.msra.mxu0 %v1715
    %1733 = vmatprep.subr.mxu0 0.0
    %1734 = vmatpush1.msra.mxu0 %v1714
    %1735 = vmatprep.subr.mxu0 0.0
    %1736 = vmatpush1.msra.mxu0 %v1713
    %1737 = vmatprep.subr.mxu0 0.0
    %1738 = vmatpush1.msra.mxu0 %v1712
    %1739 = vmatprep.subr.mxu0 0.0
    %1740 = vmatpush1.msra.mxu0 %v1711
    %1741 = vmatprep.subr.mxu0 0.0
    %1742 = vmatpush1.msra.mxu0 %v1710
    %1743 = vmatprep.subr.mxu0 0.0
    %1744 = vmatpush1.msra.mxu0 %v1709
    %1745 = vmatprep.subr.mxu0 0.0
    %1746 = vmatpush1.msra.mxu0 %v1708
    %1747 = vmatprep.subr.mxu0 0.0
    %1748 = vmatpush1.msra.mxu0 %v1707
    %1749 = vmatprep.subr.mxu0 0.0
    %1750 = vmatpush1.msra.mxu0 %v1706
    %1751 = vmatprep.subr.mxu0 0.0
    %1752 = vmatpush1.msra.mxu0 %v1705
    %1753 = vmatprep.subr.mxu0 0.0
    %1754 = vmatpush2.msra.mxu0 0.0
    %1755 = vmatprep.subr.mxu0 0.0
    %1756 = vmatpush2.msra.mxu0 0.0
    %1757 = vmatprep.subr.mxu0 0.0
    %1758 = vmatpush2.msra.mxu0 0.0
    %1759 = vmatprep.subr.mxu0 0.0
    %1760 = vmatpush2.msra.mxu0 0.0
    %1761 = vmatprep.subr.mxu0 0.0
    %1762 = vmatpush2.msra.mxu0 0.0
    %1763 = vmatprep.subr.mxu0 0.0
    %1764 = vmatpush2.msra.mxu0 0.0
    %1765 = vmatprep.subr.mxu0 0.0
    %1766 = vmatpush2.msra.mxu0 0.0
    %1767 = vmatprep.subr.mxu0 0.0
    %1768 = vmatpush2.msra.mxu0 0.0
    %1769 = vmatprep.subr.mxu0 0.0
    %1770 = vmatpush2.msra.mxu0 0.0
    %1771 = vmatprep.subr.mxu0 0.0
    %1772 = vmatpush2.msra.mxu0 0.0
    %1773 = vmatprep.subr.mxu0 0.0
    %1774 = vmatpush2.msra.mxu0 0.0
    %1775 = vmatprep.subr.mxu0 0.0
    %1776 = vmatpush2.msra.mxu0 0.0
    %1777 = vmatprep.subr.mxu0 0.0
    %1778 = vmatpush2.msra.mxu0 0.0
    %1779 = vmatprep.subr.mxu0 0.0
    %1780 = vmatpush2.msra.mxu0 0.0
    %1781 = vmatprep.subr.mxu0 0.0
    %1782 = vmatpush2.msra.mxu0 0.0
    %1783 = vmatprep.subr.mxu0 0.0
    %1784 = vmatpush2.msra.mxu0 0.0
    %1785 = vmatprep.mubr.f32.mxu0 0.0
    %1786 = vmatmul.mubr.f32.gmra.mxu0 %v1704
    %v1787 = vpop.f32.mrf.mxu0
    %v1788 = vadd.f32 0.0, %v1787
    %v1789 = vpop.f32.mrf.mxu0
    %1790 = vdwg.mxu0
    %v1792 = vlaneseq
    %v1793 = vshrl.u32 %v1792, 7
    %v1794 = vsub.s32 0, %v1793
    %v1795 = vrot.slane %v1703, %v1794
    %v1797 = vadd.f32 %v1795, %v1788
    %v1798 = vld [vmem:[#allocation2 + $0x2] sm:$0x3]
    %s1799 = scalar_lea.vmem %s5, 128
    %v1800 = vld [vmem:[%s1799] sm:$0xff]
    %v1801 = vld [vmem:[%s1799 + $0x8] sm:$0xff]
    %v1802 = vld [vmem:[%s1799 + $0x10] sm:$0xff]
    %v1803 = vld [vmem:[%s1799 + $0x18] sm:$0xff]
    %v1804 = vld [vmem:[%s1799 + $0x20] sm:$0xff]
    %v1805 = vld [vmem:[%s1799 + $0x28] sm:$0xff]
    %v1806 = vld [vmem:[%s1799 + $0x30] sm:$0xff]
    %v1807 = vld [vmem:[%s1799 + $0x38] sm:$0xff]
    %v1808 = vld [vmem:[%s1799 + $0x40] sm:$0xff]
    %v1809 = vld [vmem:[%s1799 + $0x48] sm:$0xff]
    %v1810 = vld [vmem:[%s1799 + $0x50] sm:$0xff]
    %v1811 = vld [vmem:[%s1799 + $0x58] sm:$0xff]
    %v1812 = vld [vmem:[%s1799 + $0x60] sm:$0xff]
    %v1813 = vld [vmem:[%s1799 + $0x68] sm:$0xff]
    %v1814 = vld [vmem:[%s1799 + $0x70] sm:$0xff]
    %v1815 = vld [vmem:[%s1799 + $0x78] sm:$0xff]
    %1816 = vmatprep.subr.mxu0 0.0
    %1817 = vmatpush1.msra.mxu0 %v1815
    %1818 = vmatprep.subr.mxu0 0.0
    %1819 = vmatpush1.msra.mxu0 %v1814
    %1820 = vmatprep.subr.mxu0 0.0
    %1821 = vmatpush1.msra.mxu0 %v1813
    %1822 = vmatprep.subr.mxu0 0.0
    %1823 = vmatpush1.msra.mxu0 %v1812
    %1824 = vmatprep.subr.mxu0 0.0
    %1825 = vmatpush1.msra.mxu0 %v1811
    %1826 = vmatprep.subr.mxu0 0.0
    %1827 = vmatpush1.msra.mxu0 %v1810
    %1828 = vmatprep.subr.mxu0 0.0
    %1829 = vmatpush1.msra.mxu0 %v1809
    %1830 = vmatprep.subr.mxu0 0.0
    %1831 = vmatpush1.msra.mxu0 %v1808
    %1832 = vmatprep.subr.mxu0 0.0
    %1833 = vmatpush1.msra.mxu0 %v1807
    %1834 = vmatprep.subr.mxu0 0.0
    %1835 = vmatpush1.msra.mxu0 %v1806
    %1836 = vmatprep.subr.mxu0 0.0
    %1837 = vmatpush1.msra.mxu0 %v1805
    %1838 = vmatprep.subr.mxu0 0.0
    %1839 = vmatpush1.msra.mxu0 %v1804
    %1840 = vmatprep.subr.mxu0 0.0
    %1841 = vmatpush1.msra.mxu0 %v1803
    %1842 = vmatprep.subr.mxu0 0.0
    %1843 = vmatpush1.msra.mxu0 %v1802
    %1844 = vmatprep.subr.mxu0 0.0
    %1845 = vmatpush1.msra.mxu0 %v1801
    %1846 = vmatprep.subr.mxu0 0.0
    %1847 = vmatpush1.msra.mxu0 %v1800
    %1848 = vmatprep.subr.mxu0 0.0
    %1849 = vmatpush2.msra.mxu0 0.0
    %1850 = vmatprep.subr.mxu0 0.0
    %1851 = vmatpush2.msra.mxu0 0.0
    %1852 = vmatprep.subr.mxu0 0.0
    %1853 = vmatpush2.msra.mxu0 0.0
    %1854 = vmatprep.subr.mxu0 0.0
    %1855 = vmatpush2.msra.mxu0 0.0
    %1856 = vmatprep.subr.mxu0 0.0
    %1857 = vmatpush2.msra.mxu0 0.0
    %1858 = vmatprep.subr.mxu0 0.0
    %1859 = vmatpush2.msra.mxu0 0.0
    %1860 = vmatprep.subr.mxu0 0.0
    %1861 = vmatpush2.msra.mxu0 0.0
    %1862 = vmatprep.subr.mxu0 0.0
    %1863 = vmatpush2.msra.mxu0 0.0
    %1864 = vmatprep.subr.mxu0 0.0
    %1865 = vmatpush2.msra.mxu0 0.0
    %1866 = vmatprep.subr.mxu0 0.0
    %1867 = vmatpush2.msra.mxu0 0.0
    %1868 = vmatprep.subr.mxu0 0.0
    %1869 = vmatpush2.msra.mxu0 0.0
    %1870 = vmatprep.subr.mxu0 0.0
    %1871 = vmatpush2.msra.mxu0 0.0
    %1872 = vmatprep.subr.mxu0 0.0
    %1873 = vmatpush2.msra.mxu0 0.0
    %1874 = vmatprep.subr.mxu0 0.0
    %1875 = vmatpush2.msra.mxu0 0.0
    %1876 = vmatprep.subr.mxu0 0.0
    %1877 = vmatpush2.msra.mxu0 0.0
    %1878 = vmatprep.subr.mxu0 0.0
    %1879 = vmatpush2.msra.mxu0 0.0
    %1880 = vmatprep.mubr.f32.mxu0 0.0
    %1881 = vmatmul.mubr.f32.gmra.mxu0 %v1798
    %v1882 = vpop.f32.mrf.mxu0
    %v1883 = vadd.f32 0.0, %v1882
    %v1884 = vpop.f32.mrf.mxu0
    %1885 = vdwg.mxu0
    %v1886 = vadd.f32 %v1797, %v1883
    %v1887 = vld [vmem:[#allocation2 + $0x4] sm:$0x3]
    %s1888 = scalar_lea.vmem %s5, 256
    %v1889 = vld [vmem:[%s1888] sm:$0xff]
    %v1890 = vld [vmem:[%s1888 + $0x8] sm:$0xff]
    %v1891 = vld [vmem:[%s1888 + $0x10] sm:$0xff]
    %v1892 = vld [vmem:[%s1888 + $0x18] sm:$0xff]
    %v1893 = vld [vmem:[%s1888 + $0x20] sm:$0xff]
    %v1894 = vld [vmem:[%s1888 + $0x28] sm:$0xff]
    %v1895 = vld [vmem:[%s1888 + $0x30] sm:$0xff]
    %v1896 = vld [vmem:[%s1888 + $0x38] sm:$0xff]
    %v1897 = vld [vmem:[%s1888 + $0x40] sm:$0xff]
    %v1898 = vld [vmem:[%s1888 + $0x48] sm:$0xff]
    %v1899 = vld [vmem:[%s1888 + $0x50] sm:$0xff]
    %v1900 = vld [vmem:[%s1888 + $0x58] sm:$0xff]
    %v1901 = vld [vmem:[%s1888 + $0x60] sm:$0xff]
    %v1902 = vld [vmem:[%s1888 + $0x68] sm:$0xff]
    %v1903 = vld [vmem:[%s1888 + $0x70] sm:$0xff]
    %v1904 = vld [vmem:[%s1888 + $0x78] sm:$0xff]
    %1905 = vmatprep.subr.mxu0 0.0
    %1906 = vmatpush1.msra.mxu0 %v1904
    %1907 = vmatprep.subr.mxu0 0.0
    %1908 = vmatpush1.msra.mxu0 %v1903
    %1909 = vmatprep.subr.mxu0 0.0
    %1910 = vmatpush1.msra.mxu0 %v1902
    %1911 = vmatprep.subr.mxu0 0.0
    %1912 = vmatpush1.msra.mxu0 %v1901
    %1913 = vmatprep.subr.mxu0 0.0
    %1914 = vmatpush1.msra.mxu0 %v1900
    %1915 = vmatprep.subr.mxu0 0.0
    %1916 = vmatpush1.msra.mxu0 %v1899
    %1917 = vmatprep.subr.mxu0 0.0
    %1918 = vmatpush1.msra.mxu0 %v1898
    %1919 = vmatprep.subr.mxu0 0.0
    %1920 = vmatpush1.msra.mxu0 %v1897
    %1921 = vmatprep.subr.mxu0 0.0
    %1922 = vmatpush1.msra.mxu0 %v1896
    %1923 = vmatprep.subr.mxu0 0.0
    %1924 = vmatpush1.msra.mxu0 %v1895
    %1925 = vmatprep.subr.mxu0 0.0
    %1926 = vmatpush1.msra.mxu0 %v1894
    %1927 = vmatprep.subr.mxu0 0.0
    %1928 = vmatpush1.msra.mxu0 %v1893
    %1929 = vmatprep.subr.mxu0 0.0
    %1930 = vmatpush1.msra.mxu0 %v1892
    %1931 = vmatprep.subr.mxu0 0.0
    %1932 = vmatpush1.msra.mxu0 %v1891
    %1933 = vmatprep.subr.mxu0 0.0
    %1934 = vmatpush1.msra.mxu0 %v1890
    %1935 = vmatprep.subr.mxu0 0.0
    %1936 = vmatpush1.msra.mxu0 %v1889
    %1937 = vmatprep.subr.mxu0 0.0
    %1938 = vmatpush2.msra.mxu0 0.0
    %1939 = vmatprep.subr.mxu0 0.0
    %1940 = vmatpush2.msra.mxu0 0.0
    %1941 = vmatprep.subr.mxu0 0.0
    %1942 = vmatpush2.msra.mxu0 0.0
    %1943 = vmatprep.subr.mxu0 0.0
    %1944 = vmatpush2.msra.mxu0 0.0
    %1945 = vmatprep.subr.mxu0 0.0
    %1946 = vmatpush2.msra.mxu0 0.0
    %1947 = vmatprep.subr.mxu0 0.0
    %1948 = vmatpush2.msra.mxu0 0.0
    %1949 = vmatprep.subr.mxu0 0.0
    %1950 = vmatpush2.msra.mxu0 0.0
    %1951 = vmatprep.subr.mxu0 0.0
    %1952 = vmatpush2.msra.mxu0 0.0
    %1953 = vmatprep.subr.mxu0 0.0
    %1954 = vmatpush2.msra.mxu0 0.0
    %1955 = vmatprep.subr.mxu0 0.0
    %1956 = vmatpush2.msra.mxu0 0.0
    %1957 = vmatprep.subr.mxu0 0.0
    %1958 = vmatpush2.msra.mxu0 0.0
    %1959 = vmatprep.subr.mxu0 0.0
    %1960 = vmatpush2.msra.mxu0 0.0
    %1961 = vmatprep.subr.mxu0 0.0
    %1962 = vmatpush2.msra.mxu0 0.0
    %1963 = vmatprep.subr.mxu0 0.0
    %1964 = vmatpush2.msra.mxu0 0.0
    %1965 = vmatprep.subr.mxu0 0.0
    %1966 = vmatpush2.msra.mxu0 0.0
    %1967 = vmatprep.subr.mxu0 0.0
    %1968 = vmatpush2.msra.mxu0 0.0
    %1969 = vmatprep.mubr.f32.mxu0 0.0
    %1970 = vmatmul.mubr.f32.gmra.mxu0 %v1887
    %v1971 = vpop.f32.mrf.mxu0
    %v1972 = vadd.f32 0.0, %v1971
    %v1973 = vpop.f32.mrf.mxu0
    %1974 = vdwg.mxu0
    %v1975 = vadd.f32 %v1886, %v1972
    %v1976 = vld [vmem:[#allocation2 + $0x6] sm:$0x3]
    %s1977 = scalar_lea.vmem %s5, 384
    %v1978 = vld [vmem:[%s1977] sm:$0xff]
    %v1979 = vld [vmem:[%s1977 + $0x8] sm:$0xff]
    %v1980 = vld [vmem:[%s1977 + $0x10] sm:$0xff]
    %v1981 = vld [vmem:[%s1977 + $0x18] sm:$0xff]
    %v1982 = vld [vmem:[%s1977 + $0x20] sm:$0xff]
    %v1983 = vld [vmem:[%s1977 + $0x28] sm:$0xff]
    %v1984 = vld [vmem:[%s1977 + $0x30] sm:$0xff]
    %v1985 = vld [vmem:[%s1977 + $0x38] sm:$0xff]
    %v1986 = vld [vmem:[%s1977 + $0x40] sm:$0xff]
    %v1987 = vld [vmem:[%s1977 + $0x48] sm:$0xff]
    %v1988 = vld [vmem:[%s1977 + $0x50] sm:$0xff]
    %v1989 = vld [vmem:[%s1977 + $0x58] sm:$0xff]
    %v1990 = vld [vmem:[%s1977 + $0x60] sm:$0xff]
    %v1991 = vld [vmem:[%s1977 + $0x68] sm:$0xff]
    %v1992 = vld [vmem:[%s1977 + $0x70] sm:$0xff]
    %v1993 = vld [vmem:[%s1977 + $0x78] sm:$0xff]
    %1994 = vmatprep.subr.mxu0 0.0
    %1995 = vmatpush1.msra.mxu0 %v1993
    %1996 = vmatprep.subr.mxu0 0.0
    %1997 = vmatpush1.msra.mxu0 %v1992
    %1998 = vmatprep.subr.mxu0 0.0
    %1999 = vmatpush1.msra.mxu0 %v1991
    %2000 = vmatprep.subr.mxu0 0.0
    %2001 = vmatpush1.msra.mxu0 %v1990
    %2002 = vmatprep.subr.mxu0 0.0
    %2003 = vmatpush1.msra.mxu0 %v1989
    %2004 = vmatprep.subr.mxu0 0.0
    %2005 = vmatpush1.msra.mxu0 %v1988
    %2006 = vmatprep.subr.mxu0 0.0
    %2007 = vmatpush1.msra.mxu0 %v1987
    %2008 = vmatprep.subr.mxu0 0.0
    %2009 = vmatpush1.msra.mxu0 %v1986
    %2010 = vmatprep.subr.mxu0 0.0
    %2011 = vmatpush1.msra.mxu0 %v1985
    %2012 = vmatprep.subr.mxu0 0.0
    %2013 = vmatpush1.msra.mxu0 %v1984
    %2014 = vmatprep.subr.mxu0 0.0
    %2015 = vmatpush1.msra.mxu0 %v1983
    %2016 = vmatprep.subr.mxu0 0.0
    %2017 = vmatpush1.msra.mxu0 %v1982
    %2018 = vmatprep.subr.mxu0 0.0
    %2019 = vmatpush1.msra.mxu0 %v1981
    %2020 = vmatprep.subr.mxu0 0.0
    %2021 = vmatpush1.msra.mxu0 %v1980
    %2022 = vmatprep.subr.mxu0 0.0
    %2023 = vmatpush1.msra.mxu0 %v1979
    %2024 = vmatprep.subr.mxu0 0.0
    %2025 = vmatpush1.msra.mxu0 %v1978
    %2026 = vmatprep.subr.mxu0 0.0
    %2027 = vmatpush2.msra.mxu0 0.0
    %2028 = vmatprep.subr.mxu0 0.0
    %2029 = vmatpush2.msra.mxu0 0.0
    %2030 = vmatprep.subr.mxu0 0.0
    %2031 = vmatpush2.msra.mxu0 0.0
    %2032 = vmatprep.subr.mxu0 0.0
    %2033 = vmatpush2.msra.mxu0 0.0
    %2034 = vmatprep.subr.mxu0 0.0
    %2035 = vmatpush2.msra.mxu0 0.0
    %2036 = vmatprep.subr.mxu0 0.0
    %2037 = vmatpush2.msra.mxu0 0.0
    %2038 = vmatprep.subr.mxu0 0.0
    %2039 = vmatpush2.msra.mxu0 0.0
    %2040 = vmatprep.subr.mxu0 0.0
    %2041 = vmatpush2.msra.mxu0 0.0
    %2042 = vmatprep.subr.mxu0 0.0
    %2043 = vmatpush2.msra.mxu0 0.0
    %2044 = vmatprep.subr.mxu0 0.0
    %2045 = vmatpush2.msra.mxu0 0.0
    %2046 = vmatprep.subr.mxu0 0.0
    %2047 = vmatpush2.msra.mxu0 0.0
    %2048 = vmatprep.subr.mxu0 0.0
    %2049 = vmatpush2.msra.mxu0 0.0
    %2050 = vmatprep.subr.mxu0 0.0
    %2051 = vmatpush2.msra.mxu0 0.0
    %2052 = vmatprep.subr.mxu0 0.0
    %2053 = vmatpush2.msra.mxu0 0.0
    %2054 = vmatprep.subr.mxu0 0.0
    %2055 = vmatpush2.msra.mxu0 0.0
    %2056 = vmatprep.subr.mxu0 0.0
    %2057 = vmatpush2.msra.mxu0 0.0
    %2058 = vmatprep.mubr.f32.mxu0 0.0
    %2059 = vmatmul.mubr.f32.gmra.mxu0 %v1976
    %v2060 = vpop.f32.mrf.mxu0
    %v2061 = vadd.f32 0.0, %v2060
    %v2062 = vpop.f32.mrf.mxu0
    %2063 = vdwg.mxu0
    %v2064 = vadd.f32 %v1975, %v2061
    %2065 = vst [vmem:[#allocation3] sm:$0x3] %v2064
    // Predicated region
    $region30: #{convnet_forward.1} parent=1 // pred_check
      _
    $region31: #{convnet_forward.1} parent=1 // pred_check_branch
      %2067 = sbr.rel (0) target = $region33
    $region32: #{convnet_forward.1} parent=1 // pred_region
      %s2069 = ssub.s32 32, 32
      %2070 = vsyncadd [#allocation4], %s2069
      %s2072 = sshll.u32 [#allocation3], 4
      %s2073 = int_to_ptr.vmem [resolvable:$true] %s2072
      %2075 = dma.vmem_to_hbm [thread:$0]  %s2073, 32, %s7, [#allocation4]
    $region33: #{convnet_forward.1} parent=1 // pred_fallthru
      _
    // Predicated region
    $region34: #{convnet_forward.1} parent=1 // pred_check
      _
    $region35: #{convnet_forward.1} parent=1 // pred_check_branch
      %2077 = sbr.rel (0) target = $region37
    $region36: #{convnet_forward.1} parent=1 // pred_region
      %2078 = dma.done [#allocation4], 32
    $region37: #{convnet_forward.1} parent=1 // pred_fallthru
      _
    %2079 = vsyncpa [#allocation4], 1

</llo_original>
